<compile_context>
chip_gen: v7x
topology: tpu7x:2x2x1
jax: 0.10.0
libtpu: 0.0.40
codegen_flags: <defaults>
</compile_context>

<pallas_src>
import functools

import jax
import jax.numpy as jnp
from jax import lax
from jax.experimental import pallas as pl
from jax.experimental.pallas import tpu as pltpu


# -----------------------------------------------------------------------------------
# Kernel: one grid step = Bimg images, both conv stages fused (intermediate in VMEM).
# -----------------------------------------------------------------------------------
def _double_conv_kernel(Bimg, H, W, Cin, Cmid, Cout,
                        x_ref, w1_ref, s1_ref, t1_ref, w2_ref, s2_ref, t2_ref,
                        o_ref, xpad_ref, midpad_ref):
    """
    x_ref:          (Bimg, H, W*Cin)         bf16  lane-dense input slab
    w1_ref:         (3, W*Cin,  W*Cmid)      bf16  kx-trimmed banded conv1 weights
    s1_ref, t1_ref: (1, W*Cmid)              f32   folded BN1 scale / shift (bias folded)
    w2_ref:         (3, W*Cmid, W*Cout)      bf16  kx-trimmed banded conv2 weights
    s2_ref, t2_ref: (1, W*Cout)              f32
    o_ref:          (Bimg, H, W*Cout)        f32   lane-dense output slab
    xpad_ref:       VMEM (Bimg*(H+2), W*Cin)   bf16  row-padded stacked input slab
    midpad_ref:     VMEM (Bimg*(H+2), W*Cmid)  bf16  row-padded stacked conv1 activation
    """
    Hp = H + 2
    Mtot = Bimg * Hp
    M = Mtot - 2            # matmul M; valid rows of image b are y[b*Hp : b*Hp + H]

    def band_conv(src_ref, w_ref):
        # 3 dense MXU matmuls: the kx taps + channel contraction are folded into w_ref.
        # (If the bundle dump shows full-LHS copies from these sublane-offset slices,
        #  implement the ky shift with pltpu.roll on the idle XLU slot instead.)
        acc = jnp.dot(src_ref[0:M, :], w_ref[0], preferred_element_type=jnp.float32)
        for ky in range(1, 3):
            acc = acc + jnp.dot(src_ref[ky:ky + M, :], w_ref[ky],
                                preferred_element_type=jnp.float32)
        return acc

    # ---- Stage 1: build the row-padded bf16 input slab.  Only the halo rows are zeroed
    #      (cheap, megacore-safe); the interior is fully overwritten each step with
    #      lane-offset-0 stores straight from the bf16 input block (no casts).
    zx = jnp.zeros((1, W * Cin), xpad_ref.dtype)
    for b in range(Bimg):
        xpad_ref[b * Hp:b * Hp + 1, :] = zx
        xpad_ref[b * Hp + Hp - 1:b * Hp + Hp, :] = zx
        xpad_ref[b * Hp + 1:b * Hp + 1 + H, :] = x_ref[b]

    acc1 = band_conv(xpad_ref, w1_ref)                               # (M, W*Cmid) f32
    y1 = jnp.maximum(acc1 * s1_ref[...] + t1_ref[...], 0.0)         # BN + ReLU in f32

    # ---- Stage 2 (fused): the intermediate never leaves VMEM.  The single bulk store
    #      drops y1's cross-image "seam" rows onto halo rows, which are then re-zeroed,
    #      so only valid rows feed conv2.
    midpad_ref[1:Mtot - 1, :] = y1.astype(midpad_ref.dtype)          # store y1 as bf16 once
    zm = jnp.zeros((1, W * Cmid), midpad_ref.dtype)
    for b in range(Bimg):
        midpad_ref[b * Hp:b * Hp + 1, :] = zm
        midpad_ref[b * Hp + Hp - 1:b * Hp + Hp, :] = zm

    acc2 = band_conv(midpad_ref, w2_ref)                             # (M, W*Cout) f32
    y2 = jnp.maximum(acc2 * s2_ref[...] + t2_ref[...], 0.0)

    # Lane-dense (W*Cout = 128 wide) stores; per-image extraction of the valid H rows.
    for b in range(Bimg):
        o_ref[b] = y2[b * Hp:b * Hp + H, :].astype(o_ref.dtype)


# -----------------------------------------------------------------------------------
# Host-side helpers
# -----------------------------------------------------------------------------------
def _fold_bn(bias, gamma, beta, mean, var, eps=1e-5):
    s = gamma / jnp.sqrt(var + eps)
    t = (bias - mean) * s + beta
    return s, t


def _band_conv3x3_weights(w_hwio, W, dtype=jnp.bfloat16):
    """kx-trimmed banded 3x3 conv weights.

    w_hwio: (3, 3, Cin, Cout).  Returns B of shape (3, W*Cin, W*Cout) with
        B[ky, wp*Cin + ci, w*Cout + co] = w_hwio[ky, kx, ci, co],  wp = w + kx - 1,
    out-of-range wp (the always-zero column-padding taps) simply dropped, so that
        out[h, w*Cout+co] = sum_ky  xrowpad[h+ky, :] @ B[ky]
    where xrowpad carries only the 1-row ky halo (rows 0 and H+1 zero).
    """
    kh, kw, Cin, Cout = w_hwio.shape
    wp = jnp.arange(W)[:, None, None]                  # input column
    kx = jnp.arange(kw)[None, :, None]
    wo = jnp.arange(W)[None, None, :]                  # output column
    sel = (wp == wo + kx - 1).astype(w_hwio.dtype)     # (W, 3, W), exact 0/1
    b = jnp.einsum("pxw,yxio->ypiwo", sel, w_hwio)     # (3, W, Cin, W, Cout)
    return b.reshape(kh, W * Cin, W * Cout).astype(dtype)


def _pick_images_per_step(n_images, H, target_rows=256):
    """Largest divisor of N whose stacked slab height Bimg*(H+2) fits target_rows,
    preferring to keep >= 2 grid steps so both v7x TensorCores get work."""
    divs = [b for b in range(1, n_images + 1)
            if n_images % b == 0 and b * (H + 2) <= target_rows]
    if not divs:
        return 1
    multi = [b for b in divs if n_images // b >= 2]
    return max(multi) if multi else max(divs)


def double_conv_pallas(x_nchw,
                       w1, b1, g1, be1, m1, v1,
                       w2, b2, g2, be2, m2, v2,
                       images_per_step=None):
    """Fused inconv/double_conv forward. x_nchw: (N, Cin, H, W) f32 -> (N, Cout, H, W) f32."""
    N, Cin, H, W = x_nchw.shape
    Cmid = w1.shape[-1]
    Cout = w2.shape[-1]
    Bimg = _pick_images_per_step(N, H) if images_per_step is None else images_per_step
    assert N % Bimg == 0

    # NCHW -> lane-dense (N, H, W*Cin) bf16 slab (layout plumbing, one pass over x).
    # TODO(synk): when chaining UNet stages, keep this slab layout (and bf16) between
    # stages instead of round-tripping NCHW f32 through HBM.
    x_slab = jnp.transpose(x_nchw, (0, 2, 3, 1)).reshape(N, H, W * Cin).astype(jnp.bfloat16)

    # kx-trimmed banded bf16 weights; folded BN scale/shift tiled across the (w, c) lanes.
    wb1 = _band_conv3x3_weights(w1, W)
    wb2 = _band_conv3x3_weights(w2, W)
    s1, t1 = _fold_bn(b1, g1, be1, m1, v1)
    s2, t2 = _fold_bn(b2, g2, be2, m2, v2)
    s1 = jnp.tile(s1, W).reshape(1, W * Cmid).astype(jnp.float32)
    t1 = jnp.tile(t1, W).reshape(1, W * Cmid).astype(jnp.float32)
    s2 = jnp.tile(s2, W).reshape(1, W * Cout).astype(jnp.float32)
    t2 = jnp.tile(t2, W).reshape(1, W * Cout).astype(jnp.float32)

    kernel = functools.partial(_double_conv_kernel, Bimg, H, W, Cin, Cmid, Cout)

    k1, n1 = W * Cin, W * Cmid
    k2, n2 = W * Cmid, W * Cout
    cost = pl.CostEstimate(
        flops=int(N) * 3 * 2 * H * (k1 * n1 + k2 * n2),
        transcendentals=0,
        bytes_accessed=int(x_slab.size * 2 + N * H * n2 * 4
                           + (wb1.size + wb2.size) * 2
                           + 4 * (s1.size + t1.size + s2.size + t2.size)))

    out_slab = pl.pallas_call(
        kernel,
        out_shape=jax.ShapeDtypeStruct((N, H, W * Cout), jnp.float32),
        grid_spec=pltpu.PrefetchScalarGridSpec(
            num_scalar_prefetch=0,
            grid=(N // Bimg,),
            in_specs=[
                pl.BlockSpec((Bimg, H, W * Cin), lambda n: (n, 0, 0)),
                # Grid-invariant operands below.  TODO(synk): at production channel
                # counts on v7x, single-buffer these (pipeline_mode=pl.Buffered(1)) and
                # W-tile the banded RHS to stay inside the 64 MiB/TC VMEM.
                pl.BlockSpec((3, W * Cin, W * Cmid), lambda n: (0, 0, 0)),
                pl.BlockSpec((1, W * Cmid), lambda n: (0, 0)),
                pl.BlockSpec((1, W * Cmid), lambda n: (0, 0)),
                pl.BlockSpec((3, W * Cmid, W * Cout), lambda n: (0, 0, 0)),
                pl.BlockSpec((1, W * Cout), lambda n: (0, 0)),
                pl.BlockSpec((1, W * Cout), lambda n: (0, 0)),
            ],
            out_specs=pl.BlockSpec((Bimg, H, W * Cout), lambda n: (n, 0, 0)),
            scratch_shapes=[
                pltpu.VMEM((Bimg * (H + 2), W * Cin), jnp.bfloat16),
                pltpu.VMEM((Bimg * (H + 2), W * Cmid), jnp.bfloat16),
            ],
        ),
        compiler_params=pltpu.CompilerParams(
            dimension_semantics=("parallel",),        # both v7x TCs when grid >= 2
            vmem_limit_bytes=48 * 1024 * 1024),       # explicit: v7x has only 64 MiB/TC
        cost_estimate=cost,
    )(x_slab, wb1, s1, t1, wb2, s2, t2)

    # (N, H, W*Cout) slab -> NCHW f32 (kept f32/NCHW here for standalone checking).
    return jnp.transpose(out_slab.reshape(N, H, W, Cout), (0, 3, 1, 2))


# -----------------------------------------------------------------------------------
# Module wrapper (Pallas equivalent of `inconv(in_ch, out_ch)` = double_conv, eval mode)
# -----------------------------------------------------------------------------------
class InConvPallas:
    def __init__(self, in_ch, out_ch, key):
        ks = jax.random.split(key, 12)
        self.w1 = 0.1 * jax.random.normal(ks[0], (3, 3, in_ch, out_ch), jnp.float32)
        self.b1 = 0.05 * jax.random.normal(ks[1], (out_ch,), jnp.float32)
        self.g1 = 1.0 + 0.1 * jax.random.normal(ks[2], (out_ch,), jnp.float32)
        self.beta1 = 0.1 * jax.random.normal(ks[3], (out_ch,), jnp.float32)
        self.mean1 = 0.05 * jax.random.normal(ks[4], (out_ch,), jnp.float32)
        self.var1 = jnp.abs(1.0 + 0.1 * jax.random.normal(ks[5], (out_ch,), jnp.float32))
        self.w2 = 0.1 * jax.random.normal(ks[6], (3, 3, out_ch, out_ch), jnp.float32)
        self.b2 = 0.05 * jax.random.normal(ks[7], (out_ch,), jnp.float32)
        self.g2 = 1.0 + 0.1 * jax.random.normal(ks[8], (out_ch,), jnp.float32)
        self.beta2 = 0.1 * jax.random.normal(ks[9], (out_ch,), jnp.float32)
        self.mean2 = 0.05 * jax.random.normal(ks[10], (out_ch,), jnp.float32)
        self.var2 = jnp.abs(1.0 + 0.1 * jax.random.normal(ks[11], (out_ch,), jnp.float32))

    @functools.partial(jax.jit, static_argnums=0)
    def __call__(self, x_nchw):
        return double_conv_pallas(
            x_nchw.astype(jnp.float32),
            self.w1, self.b1, self.g1, self.beta1, self.mean1, self.var1,
            self.w2, self.b2, self.g2, self.beta2, self.mean2, self.var2)


# -----------------------------------------------------------------------------------
# References
# -----------------------------------------------------------------------------------
def _reference_f32(x_nchw, mod):
    """Exact eval-mode PyTorch semantics in f32 (Conv3x3 pad=1 + bias -> BN -> ReLU) x2."""
    def conv_bn_relu(x, w_hwio, b, g, beta, mean, var):
        w_oihw = jnp.transpose(w_hwio, (3, 2, 0, 1))
        z = lax.conv_general_dilated(x, w_oihw, (1, 1), ((1, 1), (1, 1)),
                                     dimension_numbers=("NCHW", "OIHW", "NCHW"))
        s, t = _fold_bn(b, g, beta, mean, var)
        return jnp.maximum(z * s[None, :, None, None] + t[None, :, None, None], 0.0)

    y = conv_bn_relu(x_nchw, mod.w1, mod.b1, mod.g1, mod.beta1, mod.mean1, mod.var1)
    y = conv_bn_relu(y, mod.w2, mod.b2, mod.g2, mod.beta2, mod.mean2, mod.var2)
    return y


def _reference_bf16(x_nchw, mod):
    """Reference at the kernel's matmul precision: bf16 activations/weights, f32 accum."""
    x = jnp.transpose(x_nchw, (0, 2, 3, 1))   # NHWC f32

    def conv_bn_relu(x_nhwc, w_hwio, b, g, beta, mean, var):
        xb = x_nhwc.astype(jnp.bfloat16)
        wb = w_hwio.astype(jnp.bfloat16)
        xp = jnp.pad(xb, ((0, 0), (1, 1), (1, 1), (0, 0)))
        n, hp, wp, _ = xp.shape
        h, wd = hp - 2, wp - 2
        acc = jnp.zeros((n, h, wd, w_hwio.shape[-1]), jnp.float32)
        for ky in range(3):
            for kx in range(3):
                acc += jnp.einsum("nhwc,co->nhwo",
                                  xp[:, ky:ky + h, kx:kx + wd, :], wb[ky, kx],
                                  preferred_element_type=jnp.float32)
        s, t = _fold_bn(b, g, beta, mean, var)
        return jnp.maximum(acc * s + t, 0.0)

    y = conv_bn_relu(x, mod.w1, mod.b1, mod.g1, mod.beta1, mod.mean1, mod.var1)
    y = conv_bn_relu(y, mod.w2, mod.b2, mod.g2, mod.beta2, mod.mean2, mod.var2)
    return jnp.transpose(y, (0, 3, 1, 2))


# -----------------------------------------------------------------------------------
if __name__ == "__main__":
    key = jax.random.PRNGKey(0)
    k_x, k_p = jax.random.split(key)

    # N=4 so the default heuristic exercises both M-stacking (2 images / step) and a
    # 2-step parallel grid (both v7x TensorCores).
    N, in_ch, H, W = 4, 4, 16, 16
    out_ch = 8
    x = jax.random.normal(k_x, (N, in_ch, H, W), jnp.float32)

    mod = InConvPallas(in_ch, out_ch, k_p)
    out = jax.block_until_ready(mod(x))
    assert out.shape == (N, out_ch, H, W), out.shape

    # Tight check against a reference at the same bf16-matmul / f32-accumulation precision.
    ref_b = jax.block_until_ready(_reference_bf16(x, mod))
    err_b = float(jnp.max(jnp.abs(out - ref_b)))
    assert err_b < 1e-2, f"bf16-matched max abs error {err_b}"

    # Looser check against the exact f32 PyTorch (eval-mode) semantics.
    ref_f = jax.block_until_ready(_reference_f32(x, mod))
    err_f = float(jnp.max(jnp.abs(out - ref_f)))
    assert err_f < 5e-2, f"f32 max abs error {err_f}"

    print("KERNEL_OK")
</pallas_src>

<mosaic_0001>
module attributes {stable_mosaic.version = 11 : i64} {
  func.func @_double_conv_kernel(%arg0: i32, %arg1: memref<2x16x64xbf16, #tpu.memory_space<vmem>>, %arg2: memref<3x64x128xbf16, #tpu.memory_space<vmem>>, %arg3: memref<1x128xf32, #tpu.memory_space<vmem>>, %arg4: memref<1x128xf32, #tpu.memory_space<vmem>>, %arg5: memref<3x128x128xbf16, #tpu.memory_space<vmem>>, %arg6: memref<1x128xf32, #tpu.memory_space<vmem>>, %arg7: memref<1x128xf32, #tpu.memory_space<vmem>>, %arg8: memref<2x16x128xf32, #tpu.memory_space<vmem>>, %arg9: memref<36x64xbf16, #tpu.memory_space<vmem>>, %arg10: memref<36x128xbf16, #tpu.memory_space<vmem>>) attributes {dimension_semantics = [#tpu.dimension_semantics<parallel>], iteration_bounds = array<i64: 2>, scalar_prefetch = 0 : i64, scratch_operands = 2 : i64, tpu.core_type = #tpu.core_type<tc>, window_params = [{transform_indices = @transform_0, window_bounds = array<i64: 2, 16, 64>}, {pipeline_mode = #tpu.pipeline_mode<synchronous>, transform_indices = @transform_1, window_bounds = array<i64: 3, 64, 128>}, {pipeline_mode = #tpu.pipeline_mode<synchronous>, transform_indices = @transform_2, window_bounds = array<i64: 1, 128>}, {pipeline_mode = #tpu.pipeline_mode<synchronous>, transform_indices = @transform_3, window_bounds = array<i64: 1, 128>}, {pipeline_mode = #tpu.pipeline_mode<synchronous>, transform_indices = @transform_4, window_bounds = array<i64: 3, 128, 128>}, {pipeline_mode = #tpu.pipeline_mode<synchronous>, transform_indices = @transform_5, window_bounds = array<i64: 1, 128>}, {pipeline_mode = #tpu.pipeline_mode<synchronous>, transform_indices = @transform_6, window_bounds = array<i64: 1, 128>}, {transform_indices = @transform_7, window_bounds = array<i64: 2, 16, 128>}]} {
    %cst = arith.constant 0.000000e+00 : bf16
    %0 = vector.broadcast %cst : bf16 to vector<1x64xbf16>
    %c0 = arith.constant 0 : index
    %c0_0 = arith.constant 0 : index
    %1 = vector.load %arg9[%c0, %c0_0] : memref<36x64xbf16, #tpu.memory_space<vmem>>, vector<1x64xbf16>
    tpu.vector_store %arg9[%c0, %c0_0], %0 {strides = array<i32>} : memref<36x64xbf16, #tpu.memory_space<vmem>>, vector<1x64xbf16>,
    %c17 = arith.constant 17 : index
    %c0_1 = arith.constant 0 : index
    %2 = vector.load %arg9[%c17, %c0_1] : memref<36x64xbf16, #tpu.memory_space<vmem>>, vector<1x64xbf16>
    tpu.vector_store %arg9[%c17, %c0_1], %0 {strides = array<i32>} : memref<36x64xbf16, #tpu.memory_space<vmem>>, vector<1x64xbf16>,
    %c0_2 = arith.constant 0 : index
    %c0_3 = arith.constant 0 : index
    %c0_4 = arith.constant 0 : index
    %3 = vector.load %arg1[%c0_2, %c0_3, %c0_4] : memref<2x16x64xbf16, #tpu.memory_space<vmem>>, vector<1x16x64xbf16>
    %4 = vector.shape_cast %3 : vector<1x16x64xbf16> to vector<16x64xbf16>
    %c1 = arith.constant 1 : index
    %c0_5 = arith.constant 0 : index
    %5 = vector.load %arg9[%c1, %c0_5] : memref<36x64xbf16, #tpu.memory_space<vmem>>, vector<16x64xbf16>
    tpu.vector_store %arg9[%c1, %c0_5], %4 {strides = array<i32>} : memref<36x64xbf16, #tpu.memory_space<vmem>>, vector<16x64xbf16>,
    %c18 = arith.constant 18 : index
    %c0_6 = arith.constant 0 : index
    %6 = vector.load %arg9[%c18, %c0_6] : memref<36x64xbf16, #tpu.memory_space<vmem>>, vector<1x64xbf16>
    tpu.vector_store %arg9[%c18, %c0_6], %0 {strides = array<i32>} : memref<36x64xbf16, #tpu.memory_space<vmem>>, vector<1x64xbf16>,
    %c35 = arith.constant 35 : index
    %c0_7 = arith.constant 0 : index
    %7 = vector.load %arg9[%c35, %c0_7] : memref<36x64xbf16, #tpu.memory_space<vmem>>, vector<1x64xbf16>
    tpu.vector_store %arg9[%c35, %c0_7], %0 {strides = array<i32>} : memref<36x64xbf16, #tpu.memory_space<vmem>>, vector<1x64xbf16>,
    %c1_8 = arith.constant 1 : index
    %c0_9 = arith.constant 0 : index
    %c0_10 = arith.constant 0 : index
    %8 = vector.load %arg1[%c1_8, %c0_9, %c0_10] : memref<2x16x64xbf16, #tpu.memory_space<vmem>>, vector<1x16x64xbf16>
    %9 = vector.shape_cast %8 : vector<1x16x64xbf16> to vector<16x64xbf16>
    %c19 = arith.constant 19 : index
    %c0_11 = arith.constant 0 : index
    %10 = vector.load %arg9[%c19, %c0_11] : memref<36x64xbf16, #tpu.memory_space<vmem>>, vector<16x64xbf16>
    tpu.vector_store %arg9[%c19, %c0_11], %9 {strides = array<i32>} : memref<36x64xbf16, #tpu.memory_space<vmem>>, vector<16x64xbf16>,
    %c0_12 = arith.constant 0 : index
    %c0_13 = arith.constant 0 : index
    %11 = vector.load %arg9[%c0_12, %c0_13] : memref<36x64xbf16, #tpu.memory_space<vmem>>, vector<34x64xbf16>
    %c0_14 = arith.constant 0 : index
    %c0_15 = arith.constant 0 : index
    %c0_16 = arith.constant 0 : index
    %12 = vector.load %arg2[%c0_14, %c0_15, %c0_16] : memref<3x64x128xbf16, #tpu.memory_space<vmem>>, vector<1x64x128xbf16>
    %13 = vector.shape_cast %12 : vector<1x64x128xbf16> to vector<64x128xbf16>
    %cst_17 = arith.constant dense<0.000000e+00> : vector<34x128xf32>
    %14 = tpu.matmul %11, %13, %cst_17 {dimension_numbers = #tpu.dot_dimension_numbers<[1], [0], [0], [1], [0, 0, 1, 1], [], []>} : vector<34x64xbf16>, vector<64x128xbf16>, vector<34x128xf32> -> vector<34x128xf32>
    %c1_18 = arith.constant 1 : index
    %c0_19 = arith.constant 0 : index
    %15 = vector.load %arg9[%c1_18, %c0_19] : memref<36x64xbf16, #tpu.memory_space<vmem>>, vector<34x64xbf16>
    %c1_20 = arith.constant 1 : index
    %c0_21 = arith.constant 0 : index
    %c0_22 = arith.constant 0 : index
    %16 = vector.load %arg2[%c1_20, %c0_21, %c0_22] : memref<3x64x128xbf16, #tpu.memory_space<vmem>>, vector<1x64x128xbf16>
    %17 = vector.shape_cast %16 : vector<1x64x128xbf16> to vector<64x128xbf16>
    %cst_23 = arith.constant dense<0.000000e+00> : vector<34x128xf32>
    %18 = tpu.matmul %15, %17, %cst_23 {dimension_numbers = #tpu.dot_dimension_numbers<[1], [0], [0], [1], [0, 0, 1, 1], [], []>} : vector<34x64xbf16>, vector<64x128xbf16>, vector<34x128xf32> -> vector<34x128xf32>
    %19 = arith.addf %14, %18 : vector<34x128xf32>
    %c2 = arith.constant 2 : index
    %c0_24 = arith.constant 0 : index
    %20 = vector.load %arg9[%c2, %c0_24] : memref<36x64xbf16, #tpu.memory_space<vmem>>, vector<34x64xbf16>
    %c2_25 = arith.constant 2 : index
    %c0_26 = arith.constant 0 : index
    %c0_27 = arith.constant 0 : index
    %21 = vector.load %arg2[%c2_25, %c0_26, %c0_27] : memref<3x64x128xbf16, #tpu.memory_space<vmem>>, vector<1x64x128xbf16>
    %22 = vector.shape_cast %21 : vector<1x64x128xbf16> to vector<64x128xbf16>
    %cst_28 = arith.constant dense<0.000000e+00> : vector<34x128xf32>
    %23 = tpu.matmul %20, %22, %cst_28 {dimension_numbers = #tpu.dot_dimension_numbers<[1], [0], [0], [1], [0, 0, 1, 1], [], []>} : vector<34x64xbf16>, vector<64x128xbf16>, vector<34x128xf32> -> vector<34x128xf32>
    %24 = arith.addf %19, %23 : vector<34x128xf32>
    %c0_29 = arith.constant 0 : index
    %c0_30 = arith.constant 0 : index
    %25 = vector.load %arg3[%c0_29, %c0_30] : memref<1x128xf32, #tpu.memory_space<vmem>>, vector<1x128xf32>
    %26 = vector.broadcast %25 : vector<1x128xf32> to vector<34x128xf32>
    %27 = arith.mulf %24, %26 : vector<34x128xf32>
    %c0_31 = arith.constant 0 : index
    %c0_32 = arith.constant 0 : index
    %28 = vector.load %arg4[%c0_31, %c0_32] : memref<1x128xf32, #tpu.memory_space<vmem>>, vector<1x128xf32>
    %29 = vector.broadcast %28 : vector<1x128xf32> to vector<34x128xf32>
    %30 = arith.addf %27, %29 : vector<34x128xf32>
    %cst_33 = arith.constant 0.000000e+00 : f32
    %31 = vector.broadcast %cst_33 : f32 to vector<34x128xf32>
    %32 = arith.maximumf %30, %31 : vector<34x128xf32>
    %33 = arith.truncf %32 : vector<34x128xf32> to vector<34x128xbf16>
    %c1_34 = arith.constant 1 : index
    %c0_35 = arith.constant 0 : index
    %34 = vector.load %arg10[%c1_34, %c0_35] : memref<36x128xbf16, #tpu.memory_space<vmem>>, vector<34x128xbf16>
    tpu.vector_store %arg10[%c1_34, %c0_35], %33 {strides = array<i32>} : memref<36x128xbf16, #tpu.memory_space<vmem>>, vector<34x128xbf16>,
    %cst_36 = arith.constant 0.000000e+00 : bf16
    %35 = vector.broadcast %cst_36 : bf16 to vector<1x128xbf16>
    %c0_37 = arith.constant 0 : index
    %c0_38 = arith.constant 0 : index
    %36 = vector.load %arg10[%c0_37, %c0_38] : memref<36x128xbf16, #tpu.memory_space<vmem>>, vector<1x128xbf16>
    tpu.vector_store %arg10[%c0_37, %c0_38], %35 {strides = array<i32>} : memref<36x128xbf16, #tpu.memory_space<vmem>>, vector<1x128xbf16>,
    %c17_39 = arith.constant 17 : index
    %c0_40 = arith.constant 0 : index
    %37 = vector.load %arg10[%c17_39, %c0_40] : memref<36x128xbf16, #tpu.memory_space<vmem>>, vector<1x128xbf16>
    tpu.vector_store %arg10[%c17_39, %c0_40], %35 {strides = array<i32>} : memref<36x128xbf16, #tpu.memory_space<vmem>>, vector<1x128xbf16>,
    %c18_41 = arith.constant 18 : index
    %c0_42 = arith.constant 0 : index
    %38 = vector.load %arg10[%c18_41, %c0_42] : memref<36x128xbf16, #tpu.memory_space<vmem>>, vector<1x128xbf16>
    tpu.vector_store %arg10[%c18_41, %c0_42], %35 {strides = array<i32>} : memref<36x128xbf16, #tpu.memory_space<vmem>>, vector<1x128xbf16>,
    %c35_43 = arith.constant 35 : index
    %c0_44 = arith.constant 0 : index
    %39 = vector.load %arg10[%c35_43, %c0_44] : memref<36x128xbf16, #tpu.memory_space<vmem>>, vector<1x128xbf16>
    tpu.vector_store %arg10[%c35_43, %c0_44], %35 {strides = array<i32>} : memref<36x128xbf16, #tpu.memory_space<vmem>>, vector<1x128xbf16>,
    %c0_45 = arith.constant 0 : index
    %c0_46 = arith.constant 0 : index
    %40 = vector.load %arg10[%c0_45, %c0_46] : memref<36x128xbf16, #tpu.memory_space<vmem>>, vector<34x128xbf16>
    %c0_47 = arith.constant 0 : index
    %c0_48 = arith.constant 0 : index
    %c0_49 = arith.constant 0 : index
    %41 = vector.load %arg5[%c0_47, %c0_48, %c0_49] : memref<3x128x128xbf16, #tpu.memory_space<vmem>>, vector<1x128x128xbf16>
    %42 = vector.shape_cast %41 : vector<1x128x128xbf16> to vector<128x128xbf16>
    %cst_50 = arith.constant dense<0.000000e+00> : vector<34x128xf32>
    %43 = tpu.matmul %40, %42, %cst_50 {dimension_numbers = #tpu.dot_dimension_numbers<[1], [0], [0], [1], [0, 0, 1, 1], [], []>} : vector<34x128xbf16>, vector<128x128xbf16>, vector<34x128xf32> -> vector<34x128xf32>
    %c1_51 = arith.constant 1 : index
    %c0_52 = arith.constant 0 : index
    %44 = vector.load %arg10[%c1_51, %c0_52] : memref<36x128xbf16, #tpu.memory_space<vmem>>, vector<34x128xbf16>
    %c1_53 = arith.constant 1 : index
    %c0_54 = arith.constant 0 : index
    %c0_55 = arith.constant 0 : index
    %45 = vector.load %arg5[%c1_53, %c0_54, %c0_55] : memref<3x128x128xbf16, #tpu.memory_space<vmem>>, vector<1x128x128xbf16>
    %46 = vector.shape_cast %45 : vector<1x128x128xbf16> to vector<128x128xbf16>
    %cst_56 = arith.constant dense<0.000000e+00> : vector<34x128xf32>
    %47 = tpu.matmul %44, %46, %cst_56 {dimension_numbers = #tpu.dot_dimension_numbers<[1], [0], [0], [1], [0, 0, 1, 1], [], []>} : vector<34x128xbf16>, vector<128x128xbf16>, vector<34x128xf32> -> vector<34x128xf32>
    %48 = arith.addf %43, %47 : vector<34x128xf32>
    %c2_57 = arith.constant 2 : index
    %c0_58 = arith.constant 0 : index
    %49 = vector.load %arg10[%c2_57, %c0_58] : memref<36x128xbf16, #tpu.memory_space<vmem>>, vector<34x128xbf16>
    %c2_59 = arith.constant 2 : index
    %c0_60 = arith.constant 0 : index
    %c0_61 = arith.constant 0 : index
    %50 = vector.load %arg5[%c2_59, %c0_60, %c0_61] : memref<3x128x128xbf16, #tpu.memory_space<vmem>>, vector<1x128x128xbf16>
    %51 = vector.shape_cast %50 : vector<1x128x128xbf16> to vector<128x128xbf16>
    %cst_62 = arith.constant dense<0.000000e+00> : vector<34x128xf32>
    %52 = tpu.matmul %49, %51, %cst_62 {dimension_numbers = #tpu.dot_dimension_numbers<[1], [0], [0], [1], [0, 0, 1, 1], [], []>} : vector<34x128xbf16>, vector<128x128xbf16>, vector<34x128xf32> -> vector<34x128xf32>
    %53 = arith.addf %48, %52 : vector<34x128xf32>
    %c0_63 = arith.constant 0 : index
    %c0_64 = arith.constant 0 : index
    %54 = vector.load %arg6[%c0_63, %c0_64] : memref<1x128xf32, #tpu.memory_space<vmem>>, vector<1x128xf32>
    %55 = vector.broadcast %54 : vector<1x128xf32> to vector<34x128xf32>
    %56 = arith.mulf %53, %55 : vector<34x128xf32>
    %c0_65 = arith.constant 0 : index
    %c0_66 = arith.constant 0 : index
    %57 = vector.load %arg7[%c0_65, %c0_66] : memref<1x128xf32, #tpu.memory_space<vmem>>, vector<1x128xf32>
    %58 = vector.broadcast %57 : vector<1x128xf32> to vector<34x128xf32>
    %59 = arith.addf %56, %58 : vector<34x128xf32>
    %cst_67 = arith.constant 0.000000e+00 : f32
    %60 = vector.broadcast %cst_67 : f32 to vector<34x128xf32>
    %61 = arith.maximumf %59, %60 : vector<34x128xf32>
    %62 = vector.extract_strided_slice %61 {offsets = [0, 0], sizes = [16, 128], strides = [1, 1]} : vector<34x128xf32> to vector<16x128xf32>
    %c0_68 = arith.constant 0 : index
    %c0_69 = arith.constant 0 : index
    %c0_70 = arith.constant 0 : index
    %63 = vector.load %arg8[%c0_68, %c0_69, %c0_70] : memref<2x16x128xf32, #tpu.memory_space<vmem>>, vector<1x16x128xf32>
    %64 = vector.shape_cast %63 : vector<1x16x128xf32> to vector<16x128xf32>
    %65 = vector.shape_cast %62 : vector<16x128xf32> to vector<1x16x128xf32>
    tpu.vector_store %arg8[%c0_68, %c0_69, %c0_70], %65 {strides = array<i32>} : memref<2x16x128xf32, #tpu.memory_space<vmem>>, vector<1x16x128xf32>,
    %66 = vector.extract_strided_slice %61 {offsets = [18, 0], sizes = [16, 128], strides = [1, 1]} : vector<34x128xf32> to vector<16x128xf32>
    %c1_71 = arith.constant 1 : index
    %c0_72 = arith.constant 0 : index
    %c0_73 = arith.constant 0 : index
    %67 = vector.load %arg8[%c1_71, %c0_72, %c0_73] : memref<2x16x128xf32, #tpu.memory_space<vmem>>, vector<1x16x128xf32>
    %68 = vector.shape_cast %67 : vector<1x16x128xf32> to vector<16x128xf32>
    %69 = vector.shape_cast %66 : vector<16x128xf32> to vector<1x16x128xf32>
    tpu.vector_store %arg8[%c1_71, %c0_72, %c0_73], %69 {strides = array<i32>} : memref<2x16x128xf32, #tpu.memory_space<vmem>>, vector<1x16x128xf32>,
    return
  }
  func.func @transform_0(%arg0: i32) -> (i32, i32, i32) {
    %c0_i32 = arith.constant 0 : i32
    %c0_i32_0 = arith.constant 0 : i32
    %c0_i32_1 = arith.constant 0 : i32
    return %arg0, %c0_i32, %c0_i32_0 : i32, i32, i32
  }
  func.func @transform_1(%arg0: i32) -> (i32, i32, i32) {
    %c0_i32 = arith.constant 0 : i32
    %c0_i32_0 = arith.constant 0 : i32
    %c0_i32_1 = arith.constant 0 : i32
    %c0_i32_2 = arith.constant 0 : i32
    return %c0_i32, %c0_i32_0, %c0_i32_1 : i32, i32, i32
  }
  func.func @transform_2(%arg0: i32) -> (i32, i32) {
    %c0_i32 = arith.constant 0 : i32
    %c0_i32_0 = arith.constant 0 : i32
    %c0_i32_1 = arith.constant 0 : i32
    return %c0_i32, %c0_i32_0 : i32, i32
  }
  func.func @transform_3(%arg0: i32) -> (i32, i32) {
    %c0_i32 = arith.constant 0 : i32
    %c0_i32_0 = arith.constant 0 : i32
    %c0_i32_1 = arith.constant 0 : i32
    return %c0_i32, %c0_i32_0 : i32, i32
  }
  func.func @transform_4(%arg0: i32) -> (i32, i32, i32) {
    %c0_i32 = arith.constant 0 : i32
    %c0_i32_0 = arith.constant 0 : i32
    %c0_i32_1 = arith.constant 0 : i32
    %c0_i32_2 = arith.constant 0 : i32
    return %c0_i32, %c0_i32_0, %c0_i32_1 : i32, i32, i32
  }
  func.func @transform_5(%arg0: i32) -> (i32, i32) {
    %c0_i32 = arith.constant 0 : i32
    %c0_i32_0 = arith.constant 0 : i32
    %c0_i32_1 = arith.constant 0 : i32
    return %c0_i32, %c0_i32_0 : i32, i32
  }
  func.func @transform_6(%arg0: i32) -> (i32, i32) {
    %c0_i32 = arith.constant 0 : i32
    %c0_i32_0 = arith.constant 0 : i32
    %c0_i32_1 = arith.constant 0 : i32
    return %c0_i32, %c0_i32_0 : i32, i32
  }
  func.func @transform_7(%arg0: i32) -> (i32, i32, i32) {
    %c0_i32 = arith.constant 0 : i32
    %c0_i32_0 = arith.constant 0 : i32
    %c0_i32_1 = arith.constant 0 : i32
    return %arg0, %c0_i32, %c0_i32_0 : i32, i32, i32
  }
}

</mosaic_0001>

<llo_original>
// kernel: tile.18
$region0: #{tile.18}
  #allocation0 [shape = 's32[1]{0}', space=sflag, size = 0x4, scoped, tag = 'scoped memory for tile.18']
  %s0 = inlined_call_operand.vmem [shape: f32[8], index: 0, kind: input, shape index: {}]
  %s1 = inlined_call_operand.vmem [shape: f32[16,8], index: 1, kind: output, shape index: {}]
  // Predicated region
  $region2: #{tile.18} parent=0 // pred_check
    _
  $region3: #{tile.18} parent=0 // pred_check_branch
    %3 = sbr.rel (0) target = $region5
  $region4: #{tile.18} parent=0 // pred_region
    _
  $region5: #{tile.18} parent=0 // pred_fallthru
    _
  %v4 = vld [vmem:[%s0] ss:$0 sm:$0xff]
  %5 = vst [vmem:[%s1] sm:$0xff] %v4
  %s6 = scalar_lea.vmem %s1, 8
  %7 = vst [vmem:[%s6] sm:$0xff] %v4

// kernel: tile.19
$region0: #{tile.19}
  %s0 = inlined_call_operand.vmem [shape: f32[16,8], index: 0, kind: input, shape index: {}]
  %s1 = inlined_call_operand.vmem [shape: f32[1,128], index: 1, kind: output, shape index: {}]
  $region1: #{tile.19} parent=0
    #allocation0 [shape = 'u8[4096]{0}', space=vmem, size = 0x1000, scoped, tag = 'scoped mem for output reshape']
    %v2 = vld [vmem:[%s0] sm:$0x1]
    %vm3 = vcmask 64512
    %4 = vst.msk [vmem:[#allocation0] sm:$0x1] %vm3, %v2
    %s5 = scalar_lea.vmem %s0, 15
    %v6 = vld [vmem:[%s5] sm:$0x1]
    %7 = vrot.lane.b32.xlu0 %v6, 120
    %v8 = vpop.permute.xlu0 %7
    %vm9 = vcmask 1048512
    %10 = vst.msk [vmem:[#allocation0] sm:$0x1] %vm9, %v8
    %s11 = scalar_lea.vmem %s0, 14
    %v12 = vld [vmem:[%s11] sm:$0x1]
    %13 = vrot.lane.b32.xlu0 %v12, 112
    %v14 = vpop.permute.xlu0 %13
    %vm15 = vcmask 982912
    %16 = vst.msk [vmem:[#allocation0] sm:$0x1] %vm15, %v14
    %s17 = scalar_lea.vmem %s0, 13
    %v18 = vld [vmem:[%s17] sm:$0x1]
    %19 = vrot.lane.b32.xlu0 %v18, 104
    %v20 = vpop.permute.xlu0 %19
    %vm21 = vcmask 917312
    %22 = vst.msk [vmem:[#allocation0] sm:$0x1] %vm21, %v20
    %s23 = scalar_lea.vmem %s0, 12
    %v24 = vld [vmem:[%s23] sm:$0x1]
    %25 = vrot.lane.b32.xlu0 %v24, 96
    %v26 = vpop.permute.xlu0 %25
    %vm27 = vcmask 851712
    %28 = vst.msk [vmem:[#allocation0] sm:$0x1] %vm27, %v26
    %s29 = scalar_lea.vmem %s0, 11
    %v30 = vld [vmem:[%s29] sm:$0x1]
    %31 = vrot.lane.b32.xlu0 %v30, 88
    %v32 = vpop.permute.xlu0 %31
    %vm33 = vcmask 786112
    %34 = vst.msk [vmem:[#allocation0] sm:$0x1] %vm33, %v32
    %s35 = scalar_lea.vmem %s0, 10
    %v36 = vld [vmem:[%s35] sm:$0x1]
    %37 = vrot.lane.b32.xlu0 %v36, 80
    %v38 = vpop.permute.xlu0 %37
    %vm39 = vcmask 720512
    %40 = vst.msk [vmem:[#allocation0] sm:$0x1] %vm39, %v38
    %s41 = scalar_lea.vmem %s0, 9
    %v42 = vld [vmem:[%s41] sm:$0x1]
    %43 = vrot.lane.b32.xlu0 %v42, 72
    %v44 = vpop.permute.xlu0 %43
    %vm45 = vcmask 654912
    %46 = vst.msk [vmem:[#allocation0] sm:$0x1] %vm45, %v44
    %s47 = scalar_lea.vmem %s0, 8
    %v48 = vld [vmem:[%s47] sm:$0x1]
    %49 = vrot.lane.b32.xlu0 %v48, 64
    %v50 = vpop.permute.xlu0 %49
    %vm51 = vcmask 589312
    %52 = vst.msk [vmem:[#allocation0] sm:$0x1] %vm51, %v50
    %s53 = scalar_lea.vmem %s0, 7
    %v54 = vld [vmem:[%s53] sm:$0x1]
    %55 = vrot.lane.b32.xlu0 %v54, 56
    %v56 = vpop.permute.xlu0 %55
    %vm57 = vcmask 523712
    %58 = vst.msk [vmem:[#allocation0] sm:$0x1] %vm57, %v56
    %s59 = scalar_lea.vmem %s0, 6
    %v60 = vld [vmem:[%s59] sm:$0x1]
    %61 = vrot.lane.b32.xlu0 %v60, 48
    %v62 = vpop.permute.xlu0 %61
    %vm63 = vcmask 458112
    %64 = vst.msk [vmem:[#allocation0] sm:$0x1] %vm63, %v62
    %s65 = scalar_lea.vmem %s0, 5
    %v66 = vld [vmem:[%s65] sm:$0x1]
    %67 = vrot.lane.b32.xlu0 %v66, 40
    %v68 = vpop.permute.xlu0 %67
    %vm69 = vcmask 392512
    %70 = vst.msk [vmem:[#allocation0] sm:$0x1] %vm69, %v68
    %s71 = scalar_lea.vmem %s0, 4
    %v72 = vld [vmem:[%s71] sm:$0x1]
    %73 = vrot.lane.b32.xlu0 %v72, 32
    %v74 = vpop.permute.xlu0 %73
    %vm75 = vcmask 326912
    %76 = vst.msk [vmem:[#allocation0] sm:$0x1] %vm75, %v74
    %s77 = scalar_lea.vmem %s0, 3
    %v78 = vld [vmem:[%s77] sm:$0x1]
    %79 = vrot.lane.b32.xlu0 %v78, 24
    %v80 = vpop.permute.xlu0 %79
    %vm81 = vcmask 261312
    %82 = vst.msk [vmem:[#allocation0] sm:$0x1] %vm81, %v80
    %s83 = scalar_lea.vmem %s0, 2
    %v84 = vld [vmem:[%s83] sm:$0x1]
    %85 = vrot.lane.b32.xlu0 %v84, 16
    %v86 = vpop.permute.xlu0 %85
    %vm87 = vcmask 195712
    %88 = vst.msk [vmem:[#allocation0] sm:$0x1] %vm87, %v86
    %s89 = scalar_lea.vmem %s0, 1
    %v90 = vld [vmem:[%s89] sm:$0x1]
    %91 = vrot.lane.b32.xlu0 %v90, 8
    %v92 = vpop.permute.xlu0 %91
    %vm93 = vcmask 130112
    %94 = vst.msk [vmem:[#allocation0] sm:$0x1] %vm93, %v92
    %s96 = sshllo.u32 0, 1
    %v98 = vld [vmem:[#allocation0] sm:%s96]
    %s99 = sshllo.u32 0, 1
    %100 = vst [vmem:[%s1] sm:%s99] %v98

// kernel: a_call__.1
$region0: #{a_call__.1}
  #allocation0 [shape = 'u32[]', space=smem, size = 0x4, offset = 0x4, fixed_abs, tag = 'smem constant byte address 0x4 - core index']
  #allocation1 [shape = 'u32[144,128]{1,0:T(1,128)}', space=vmem, size = 0x12000, scoped, tag = 'internal scratch']
  #allocation2 [shape = 'bf16[36,64]{1,0:T(8,128)(2,1)}', space=vmem, size = 0x2800, scoped, tag = 'scratch operand']
  #allocation3 [shape = 'bf16[36,128]{1,0:T(8,128)(2,1)}', space=vmem, size = 0x2800, scoped, tag = 'scratch operand']
  %s0 = inlined_call_operand.vmem [shape: bf16[4,16,64], index: 0, kind: input, shape index: {}]
  %s1 = inlined_call_operand.vmem [shape: bf16[3,64,128], index: 1, kind: input, shape index: {}]
  %s2 = inlined_call_operand.vmem [shape: f32[1,128], index: 2, kind: input, shape index: {}]
  %s3 = inlined_call_operand.vmem [shape: f32[1,128], index: 3, kind: input, shape index: {}]
  %s4 = inlined_call_operand.vmem [shape: bf16[3,128,128], index: 4, kind: input, shape index: {}]
  %s5 = inlined_call_operand.vmem [shape: f32[1,128], index: 5, kind: input, shape index: {}]
  %s6 = inlined_call_operand.vmem [shape: f32[1,128], index: 6, kind: input, shape index: {}]
  %s7 = inlined_call_operand.vmem [shape: f32[4,16,128], index: 7, kind: output, shape index: {}]
  %s8 = sld [smem:[#allocation0]]
  $region61: #{a_call__.1} parent=0
    _
  %s10 = ssub.s32 1, %s8
  %s11 = scalar_select 0, %s10, %s8
  loop: start=0, step=1, limit=4
  $region2: #{a_call__.1} parent=0 // loop_pre_header
    _
  $region3: #{a_call__.1} parent=0 // loop_header
    %s13 = sphi 0, %s17
    %p14 = scmp.ge.s32.totalorder %s13, 4
    %s23 = sphi 0, %s25
    %s26 = sphi 0, %s23
    %s27 = sphi 0, %s26
    %s43 = sphi 0, %s27
    %s47 = sphi 0, %s47
    %s49 = sphi 0, %s47
    %s50 = sphi 0, %s49
    %s64 = sphi 0, %s50
    %s68 = sphi 0, %s68
    %s70 = sphi 0, %s68
    %s71 = sphi 0, %s70
    %s85 = sphi 0, %s71
    %s89 = sphi 0, %s89
    %s91 = sphi 0, %s89
    %s92 = sphi 0, %s91
    %s106 = sphi 0, %s92
    %s110 = sphi 0, %s110
    %s112 = sphi 0, %s110
    %s113 = sphi 0, %s112
    %s127 = sphi 0, %s113
    %s131 = sphi 0, %s131
    %s133 = sphi 0, %s131
    %s134 = sphi 0, %s133
    %s148 = sphi 0, %s134
    %s152 = sphi 0, %s152
    %s154 = sphi 0, %s152
    %s155 = sphi 0, %s154
    %s169 = sphi 0, %s155
    %s175 = sphi 0, %s177
    %s178 = sphi 0, %s175
    %s179 = sphi 0, %s178
    %s195 = sphi 0, %s179
  $region4: #{a_call__.1} parent=0 // loop_header_branch
    %16 = sbr.rel (%p14) target = $region8
  $region5: #{a_call__.1} parent=0 // loop_body
    %s18 = ssub.s32 %s13, 1
    %s19 = ssub.s32 %s13, 2
    %s20 = sadd.s32 %s13, 1
    %s21 = ssub.s32 %s13, %s20
    %p22 = scmp.eq.s32.totalorder %s21, 0
    %s24 = sadd.s32 %s23, 1
    %s25 = scalar_select %p22, %s23, %s24
    %p28 = pneg %p22
    %p29 = scmp.eq.s32.totalorder %s13, 1
    %p30 = por %p28, %p29
    %p31 = scmp.ne.s32.totalorder %s23, %s26
    %p32 = scmp.eq.s32.totalorder %s13, 0
    %p33 = por %p31, %p32
    %p34 = scmp.ne.s32.totalorder %s23, %s26
    %p35 = scmp.eq.s32.totalorder %s18, 1
    %p36 = por %p34, %p35
    %p37 = scmp.ne.s32.totalorder %s26, %s27
    %p38 = scmp.eq.s32.totalorder %s18, 0
    %p39 = por %p37, %p38
    %p40 = scmp.ne.s32.totalorder %s26, %s27
    %p41 = scmp.eq.s32.totalorder %s19, 1
    %p42 = por %p40, %p41
    %p44 = scmp.ne.s32.totalorder %s27, %s43
    %p45 = scmp.eq.s32.totalorder %s19, 0
    %p46 = por %p44, %p45
    %s48 = sadd.s32 %s47, 1
    %p51 = scmp.eq.s32.totalorder %s13, 1
    %p52 = scmp.ne.s32.totalorder %s47, %s49
    %p53 = scmp.eq.s32.totalorder %s13, 0
    %p54 = por %p52, %p53
    %p55 = scmp.ne.s32.totalorder %s47, %s49
    %p56 = scmp.eq.s32.totalorder %s18, 1
    %p57 = por %p55, %p56
    %p58 = scmp.ne.s32.totalorder %s49, %s50
    %p59 = scmp.eq.s32.totalorder %s18, 0
    %p60 = por %p58, %p59
    %p61 = scmp.ne.s32.totalorder %s49, %s50
    %p62 = scmp.eq.s32.totalorder %s19, 1
    %p63 = por %p61, %p62
    %p65 = scmp.ne.s32.totalorder %s50, %s64
    %p66 = scmp.eq.s32.totalorder %s19, 0
    %p67 = por %p65, %p66
    %s69 = sadd.s32 %s68, 1
    %p72 = scmp.eq.s32.totalorder %s13, 1
    %p73 = scmp.ne.s32.totalorder %s68, %s70
    %p74 = scmp.eq.s32.totalorder %s13, 0
    %p75 = por %p73, %p74
    %p76 = scmp.ne.s32.totalorder %s68, %s70
    %p77 = scmp.eq.s32.totalorder %s18, 1
    %p78 = por %p76, %p77
    %p79 = scmp.ne.s32.totalorder %s70, %s71
    %p80 = scmp.eq.s32.totalorder %s18, 0
    %p81 = por %p79, %p80
    %p82 = scmp.ne.s32.totalorder %s70, %s71
    %p83 = scmp.eq.s32.totalorder %s19, 1
    %p84 = por %p82, %p83
    %p86 = scmp.ne.s32.totalorder %s71, %s85
    %p87 = scmp.eq.s32.totalorder %s19, 0
    %p88 = por %p86, %p87
    %s90 = sadd.s32 %s89, 1
    %p93 = scmp.eq.s32.totalorder %s13, 1
    %p94 = scmp.ne.s32.totalorder %s89, %s91
    %p95 = scmp.eq.s32.totalorder %s13, 0
    %p96 = por %p94, %p95
    %p97 = scmp.ne.s32.totalorder %s89, %s91
    %p98 = scmp.eq.s32.totalorder %s18, 1
    %p99 = por %p97, %p98
    %p100 = scmp.ne.s32.totalorder %s91, %s92
    %p101 = scmp.eq.s32.totalorder %s18, 0
    %p102 = por %p100, %p101
    %p103 = scmp.ne.s32.totalorder %s91, %s92
    %p104 = scmp.eq.s32.totalorder %s19, 1
    %p105 = por %p103, %p104
    %p107 = scmp.ne.s32.totalorder %s92, %s106
    %p108 = scmp.eq.s32.totalorder %s19, 0
    %p109 = por %p107, %p108
    %s111 = sadd.s32 %s110, 1
    %p114 = scmp.eq.s32.totalorder %s13, 1
    %p115 = scmp.ne.s32.totalorder %s110, %s112
    %p116 = scmp.eq.s32.totalorder %s13, 0
    %p117 = por %p115, %p116
    %p118 = scmp.ne.s32.totalorder %s110, %s112
    %p119 = scmp.eq.s32.totalorder %s18, 1
    %p120 = por %p118, %p119
    %p121 = scmp.ne.s32.totalorder %s112, %s113
    %p122 = scmp.eq.s32.totalorder %s18, 0
    %p123 = por %p121, %p122
    %p124 = scmp.ne.s32.totalorder %s112, %s113
    %p125 = scmp.eq.s32.totalorder %s19, 1
    %p126 = por %p124, %p125
    %p128 = scmp.ne.s32.totalorder %s113, %s127
    %p129 = scmp.eq.s32.totalorder %s19, 0
    %p130 = por %p128, %p129
    %s132 = sadd.s32 %s131, 1
    %p135 = scmp.eq.s32.totalorder %s13, 1
    %p136 = scmp.ne.s32.totalorder %s131, %s133
    %p137 = scmp.eq.s32.totalorder %s13, 0
    %p138 = por %p136, %p137
    %p139 = scmp.ne.s32.totalorder %s131, %s133
    %p140 = scmp.eq.s32.totalorder %s18, 1
    %p141 = por %p139, %p140
    %p142 = scmp.ne.s32.totalorder %s133, %s134
    %p143 = scmp.eq.s32.totalorder %s18, 0
    %p144 = por %p142, %p143
    %p145 = scmp.ne.s32.totalorder %s133, %s134
    %p146 = scmp.eq.s32.totalorder %s19, 1
    %p147 = por %p145, %p146
    %p149 = scmp.ne.s32.totalorder %s134, %s148
    %p150 = scmp.eq.s32.totalorder %s19, 0
    %p151 = por %p149, %p150
    %s153 = sadd.s32 %s152, 1
    %p156 = scmp.eq.s32.totalorder %s13, 1
    %p157 = scmp.ne.s32.totalorder %s152, %s154
    %p158 = scmp.eq.s32.totalorder %s13, 0
    %p159 = por %p157, %p158
    %p160 = scmp.ne.s32.totalorder %s152, %s154
    %p161 = scmp.eq.s32.totalorder %s18, 1
    %p162 = por %p160, %p161
    %p163 = scmp.ne.s32.totalorder %s154, %s155
    %p164 = scmp.eq.s32.totalorder %s18, 0
    %p165 = por %p163, %p164
    %p166 = scmp.ne.s32.totalorder %s154, %s155
    %p167 = scmp.eq.s32.totalorder %s19, 1
    %p168 = por %p166, %p167
    %p170 = scmp.ne.s32.totalorder %s155, %s169
    %p171 = scmp.eq.s32.totalorder %s19, 0
    %p172 = por %p170, %p171
    %s173 = ssub.s32 %s13, %s20
    %p174 = scmp.eq.s32.totalorder %s173, 0
    %s176 = sadd.s32 %s175, 1
    %s177 = scalar_select %p174, %s175, %s176
    %p180 = pneg %p174
    %p181 = scmp.eq.s32.totalorder %s13, 1
    %p182 = por %p180, %p181
    %p183 = scmp.ne.s32.totalorder %s175, %s178
    %p184 = scmp.eq.s32.totalorder %s13, 0
    %p185 = por %p183, %p184
    %p186 = scmp.ne.s32.totalorder %s175, %s178
    %p187 = scmp.eq.s32.totalorder %s18, 1
    %p188 = por %p186, %p187
    %p189 = scmp.ne.s32.totalorder %s178, %s179
    %p190 = scmp.eq.s32.totalorder %s18, 0
    %p191 = por %p189, %p190
    %p192 = scmp.ne.s32.totalorder %s178, %s179
    %p193 = scmp.eq.s32.totalorder %s19, 1
    %p194 = por %p192, %p193
    %p196 = scmp.ne.s32.totalorder %s179, %s195
    %p197 = scmp.eq.s32.totalorder %s19, 0
    %p198 = por %p196, %p197
    %p199 = scmp.le.s32.totalorder 1, %s13
    %p200 = scmp.lt.s32.totalorder %s13, 3
    %p201 = pnand %p199, %p200
    %p202 = pneg %p201
    // Predicated region
    $region9: #{a_call__.1} parent=5 // pred_check
      _
    $region10: #{a_call__.1} parent=5 // pred_check_branch
      %204 = sbr.rel (%p201) target = $region12
    $region11: #{a_call__.1} parent=5 // pred_region
      %s205 = ssub.s32 %s13, 1
      // Predicated region
      $region13: #{a_call__.1} parent=11 // pred_check
        %p206 = pneg %p60
      $region14: #{a_call__.1} parent=11 // pred_check_branch
        %208 = sbr.rel (%p206) target = $region16
      $region15: #{a_call__.1} parent=11 // pred_region
        _
      $region16: #{a_call__.1} parent=11 // pred_fallthru
        _
      // Predicated region
      $region17: #{a_call__.1} parent=11 // pred_check
        %p209 = pneg %p81
      $region18: #{a_call__.1} parent=11 // pred_check_branch
        %211 = sbr.rel (%p209) target = $region20
      $region19: #{a_call__.1} parent=11 // pred_region
        _
      $region20: #{a_call__.1} parent=11 // pred_fallthru
        _
      // Predicated region
      $region21: #{a_call__.1} parent=11 // pred_check
        %p212 = pneg %p102
      $region22: #{a_call__.1} parent=11 // pred_check_branch
        %214 = sbr.rel (%p212) target = $region24
      $region23: #{a_call__.1} parent=11 // pred_region
        _
      $region24: #{a_call__.1} parent=11 // pred_fallthru
        _
      // Predicated region
      $region25: #{a_call__.1} parent=11 // pred_check
        %p215 = pneg %p123
      $region26: #{a_call__.1} parent=11 // pred_check_branch
        %217 = sbr.rel (%p215) target = $region28
      $region27: #{a_call__.1} parent=11 // pred_region
        _
      $region28: #{a_call__.1} parent=11 // pred_fallthru
        _
      // Predicated region
      $region29: #{a_call__.1} parent=11 // pred_check
        %p218 = pneg %p144
      $region30: #{a_call__.1} parent=11 // pred_check_branch
        %220 = sbr.rel (%p218) target = $region32
      $region31: #{a_call__.1} parent=11 // pred_region
        _
      $region32: #{a_call__.1} parent=11 // pred_fallthru
        _
      // Predicated region
      $region33: #{a_call__.1} parent=11 // pred_check
        %p221 = pneg %p165
      $region34: #{a_call__.1} parent=11 // pred_check_branch
        %223 = sbr.rel (%p221) target = $region36
      $region35: #{a_call__.1} parent=11 // pred_region
        _
      $region36: #{a_call__.1} parent=11 // pred_fallthru
        _
    $region12: #{a_call__.1} parent=5 // pred_fallthru
      _
    %p224 = scmp.lt.s32.totalorder %s13, 2
    // Predicated region
    $region37: #{a_call__.1} parent=5 // pred_check
      %p225 = pneg %p224
    $region38: #{a_call__.1} parent=5 // pred_check_branch
      %227 = sbr.rel (%p225) target = $region40
    $region39: #{a_call__.1} parent=5 // pred_region
      // Predicated region
      $region41: #{a_call__.1} parent=39 // pred_check
        %p228 = pneg %p33
      $region42: #{a_call__.1} parent=39 // pred_check_branch
        %230 = sbr.rel (%p228) target = $region44
      $region43: #{a_call__.1} parent=39 // pred_region
        %s231 = smul.u32 2, %s13
        %p232 = scmp.lt.s32.totalorder %s231, 3
        %s233 = scalar_select %p232, %s231, 3
        %s234 = smul.addr %s233, 2
        %s235 = smul.addr %s234, 4
        %s236 = scalar_lea.vmem %s0, %s235
        %s237 = smul.u32 2, %s13
      $region44: #{a_call__.1} parent=39 // pred_fallthru
        _
    $region40: #{a_call__.1} parent=5 // pred_fallthru
      _
    %p238 = scmp.le.s32.totalorder 1, %s13
    %p239 = scmp.lt.s32.totalorder %s13, 3
    %p240 = pnand %p238, %p239
    %p241 = pneg %p240
    // Predicated region
    $region45: #{a_call__.1} parent=5 // pred_check
      _
    $region46: #{a_call__.1} parent=5 // pred_check_branch
      %243 = sbr.rel (%p240) target = $region48
    $region47: #{a_call__.1} parent=5 // pred_region
      %s244 = ssub.s32 %s13, 1
      %s245 = smul.u32 2, %s18
      %p246 = scmp.lt.s32.totalorder %s245, 3
      %s247 = scalar_select %p246, %s245, 3
      %s248 = smul.addr %s247, 2
      %s249 = smul.addr %s248, 4
      %s250 = scalar_lea.vmem %s0, %s249
      %p251 = pneg %p39
      %p252 = pneg %p36
      %p253 = pneg %p60
      %p254 = pneg %p57
      %p255 = pneg %p81
      %p256 = pneg %p78
      %p257 = pneg %p102
      %p258 = pneg %p99
      %p259 = pneg %p123
      %p260 = pneg %p120
      %p261 = pneg %p144
      %p262 = pneg %p141
      %p263 = pneg %p165
      %p264 = pneg %p162
      %p265 = pneg %p191
      %p266 = pneg %p188
      %s267 = smul.u32 2, %s18
      %p268 = scmp.lt.s32.totalorder %s267, 3
      %s269 = scalar_select %p268, %s267, 3
      %s270 = smul.addr %s269, 2
      %s271 = smul.addr %s270, 8
      %s272 = scalar_lea.vmem %s7, %s271
      %s273 = smul.u32 2, %s18
      %p274 = scmp.lt.s32.totalorder %s273, 3
      %s275 = scalar_select %p274, %s273, 3
      %s276 = smul.addr %s275, 2
      %s277 = smul.addr %s276, 4
      %s278 = scalar_lea.vmem %s0, %s277
      %s279 = smul.u32 2, %s18
      %s280 = smul.u32 2, %s18
      %p281 = scmp.lt.s32.totalorder %s280, 3
      %s282 = scalar_select %p281, %s280, 3
      %s283 = smul.addr %s282, 2
      %s284 = smul.addr %s283, 8
      %s285 = scalar_lea.vmem %s7, %s284
      %s286 = smul.u32 2, %s18
      %vm288 = vcmask 516096
      %vm289 = vsmask.f32 256
      %vm290 = vmand %vm288, %vm289
      %v291 = vld [vmem:[#allocation2] sm:$0x1]
      %v292 = vsel %vm290, 0, %v291
      %293 = vst [vmem:[#allocation2] sm:$0x1] %v292
      %vm294 = vsmask.f32 7938
      %vm295 = vmand %vm288, %vm294
      %v296 = vld [vmem:[#allocation2 + $0x8] sm:$0x1]
      %v297 = vsel %vm295, 0, %v296
      %298 = vst [vmem:[#allocation2 + $0x8] sm:$0x1] %v297
      %v299 = vld [vmem:[%s278] sm:$0xf]
      %v300 = vld [vmem:[%s278 + $0x4] sm:$0xf]
      %vm301 = vsmask.f32 4368
      %vm302 = vmor %vm289, %vm301
      %v304 = vshrl.u32 %v299, 16
      %v306 = vrot.slane %v304, 7
      %v307 = vshll.u32 %v299, 16
      %v309 = vor.u32 %v306, %v307
      %v310 = vrot.slane %v306, 4
      %v312 = vshrl.u32 %v300, 16
      %v314 = vrot.slane %v312, 7
      %v315 = vshll.u32 %v300, 16
      %v317 = vor.u32 %v314, %v315
      %v318 = vsel %vm302, %v310, %v317
      %v319 = vrot.slane %v314, 4
      %vm323 = vcmask 519168
      %vm324 = vmand %vm323, %vm294
      %v325 = vld [vmem:[#allocation2] sm:$0xf]
      %v326 = vsel %vm324, %v309, %v325
      %327 = vst [vmem:[#allocation2] sm:$0xf] %v326
      %vm328 = vcmask 519168
      %329 = vst.msk [vmem:[#allocation2 + $0x4] sm:$0xf] %vm328, %v318
      %v330 = vld [vmem:[#allocation2 + $0x8] sm:$0x1]
      %v331 = vsel %vm290, %v319, %v330
      %332 = vst [vmem:[#allocation2 + $0x8] sm:$0x1] %v331
      %vm333 = vcmask 517121
      %vm334 = vsmask.f32 1280
      %vm335 = vmand %vm333, %vm334
      %v336 = vld [vmem:[#allocation2 + $0x8] sm:$0x2]
      %v337 = vsel %vm335, 0, %v336
      %338 = vst [vmem:[#allocation2 + $0x8] sm:$0x2] %v337
      %vm339 = vsmask.f32 7942
      %vm340 = vmand %vm333, %vm339
      %v341 = vld [vmem:[#allocation2 + $0x10] sm:$0x2]
      %v342 = vsel %vm340, 0, %v341
      %343 = vst [vmem:[#allocation2 + $0x10] sm:$0x2] %v342
      %s344 = scalar_lea.vmem %s278, 8
      %v345 = vld [vmem:[%s344] sm:$0xf]
      %v346 = vld [vmem:[%s344 + $0x4] sm:$0xf]
      %vm347 = vsmask.f32 5392
      %vm348 = vmor %vm334, %vm347
      %v350 = vshrl.u32 %v345, 16
      %v352 = vrot.slane %v350, 6
      %v353 = vshll.u32 %v345, 16
      %v355 = vrot.slane %v353, 7
      %v356 = vor.u32 %v352, %v355
      %v357 = vrot.slane %v356, 4
      %v359 = vshrl.u32 %v346, 16
      %v361 = vrot.slane %v359, 6
      %v362 = vshll.u32 %v346, 16
      %v364 = vrot.slane %v362, 7
      %v365 = vor.u32 %v361, %v364
      %v366 = vsel %vm348, %v357, %v365
      %v367 = vrot.slane %v365, 4
      %vm371 = vcmask 519169
      %vm372 = vmand %vm371, %vm339
      %v373 = vld [vmem:[#allocation2 + $0x8] sm:$0xe]
      %v374 = vsel %vm372, %v356, %v373
      %375 = vst [vmem:[#allocation2 + $0x8] sm:$0xe] %v374
      %376 = vst.msk [vmem:[#allocation2 + $0xc] sm:$0xf] %vm328, %v366
      %vm377 = vcmask 517120
      %vm378 = vmand %vm377, %vm334
      %v379 = vld [vmem:[#allocation2 + $0x10] sm:$0x3]
      %v380 = vsel %vm378, %v367, %v379
      %381 = vst [vmem:[#allocation2 + $0x10] sm:$0x3] %v380
      %v382 = vld [vmem:[#allocation2] sm:$0xf]
      %v383 = vld [vmem:[#allocation2 + $0x4] sm:$0xf]
      %v384 = vld [vmem:[#allocation2 + $0x8] sm:$0xf]
      %v385 = vld [vmem:[#allocation2 + $0xc] sm:$0xf]
      %v386 = vld [vmem:[#allocation2 + $0x10] sm:$0x1]
      %v387 = vld [vmem:[%s1] sm:$0xf]
      %v388 = vld [vmem:[%s1 + $0x4] sm:$0xf]
      %v389 = vld [vmem:[%s1 + $0x8] sm:$0xf]
      %v390 = vld [vmem:[%s1 + $0xc] sm:$0xf]
      %v391 = vld [vmem:[%s1 + $0x10] sm:$0xf]
      %v392 = vld [vmem:[%s1 + $0x14] sm:$0xf]
      %v393 = vld [vmem:[%s1 + $0x18] sm:$0xf]
      %v394 = vld [vmem:[%s1 + $0x1c] sm:$0xf]
      %v395 = vld [vmem:[#allocation2 + $0x10] sm:$0x3]
      %s396 = scalar_lea.vmem %s1, 32
      %v397 = vld [vmem:[%s396] sm:$0xf]
      %v398 = vld [vmem:[%s396 + $0x4] sm:$0xf]
      %v399 = vld [vmem:[%s396 + $0x8] sm:$0xf]
      %v400 = vld [vmem:[%s396 + $0xc] sm:$0xf]
      %v401 = vld [vmem:[%s396 + $0x10] sm:$0xf]
      %v402 = vld [vmem:[%s396 + $0x14] sm:$0xf]
      %v403 = vld [vmem:[%s396 + $0x18] sm:$0xf]
      %v404 = vld [vmem:[%s396 + $0x1c] sm:$0xf]
      %v410 = vunpack.c.l.b16 %v382
      %v411 = vunpack.c.l.b16 %v383
      %v412 = vunpack.c.l.b16 %v384
      %v413 = vunpack.c.l.b16 %v385
      %v414 = vunpack.c.l.b16 %v395
      %v415 = vpack.c.b16 %v411, %v410
      %v416 = vpack.c.b16 %v413, %v412
      %v417 = vpack.c.b16 %v414, %v414
      %vm418 = vsmask.f32 7424
      %v420 = vshrl.u32 %v415, 16
      %v422 = vshll.u32 %v415, 16
      %v424 = vrot.slane %v422, 1
      %v425 = vor.u32 %v420, %v424
      %v427 = vshll.u32 %v416, 16
      %v429 = vrot.slane %v427, 1
      %v430 = vsel %vm418, %v425, %v429
      %v431 = vshrl.u32 %v416, 16
      %v433 = vor.u32 %v431, %v429
      %v435 = vshll.u32 %v417, 16
      %v437 = vrot.slane %v435, 1
      %v438 = vsel %vm418, %v433, %v437
      %v439 = vshrl.u32 %v417, 16
      %v441 = vor.u32 %v439, %v437
      %v450 = vunpack.c.l.b16 %v397
      %v451 = vunpack.c.l.b16 %v398
      %v452 = vunpack.c.l.b16 %v399
      %v453 = vunpack.c.l.b16 %v400
      %v454 = vunpack.c.l.b16 %v401
      %v455 = vunpack.c.l.b16 %v402
      %v456 = vunpack.c.l.b16 %v403
      %v457 = vunpack.c.l.b16 %v404
      %v458 = vpack.c.b16 %v451, %v450
      %v459 = vpack.c.b16 %v453, %v452
      %v460 = vpack.c.b16 %v455, %v454
      %v461 = vpack.c.b16 %v457, %v456
      %vm466 = vcmask 523264
      %v468 = vsel %vm466, %v430, 0
      %v471 = vsel %vm466, %v438, 0
      %v474 = vsel %vm466, %v441, 0
      %476 = vmatprep.subr.bf16.mxu0 0
      %477 = vmatpush1.bf16.msra.mxu0 %v458
      %478 = vmatprep.subr.bf16.mxu0 0
      %479 = vmatpush1.bf16.msra.mxu0 %v459
      %480 = vmatprep.subr.bf16.mxu0 0
      %481 = vmatpush1.bf16.msra.mxu0 %v460
      %482 = vmatprep.subr.bf16.mxu0 0
      %483 = vmatpush1.bf16.msra.mxu0 %v461
      %484 = vmatprep.subr.bf16.mxu0 0
      %485 = vmatpush1.bf16.msra.mxu0 0
      %486 = vmatprep.subr.bf16.mxu0 0
      %487 = vmatpush1.bf16.msra.mxu0 0
      %488 = vmatprep.subr.bf16.mxu0 0
      %489 = vmatpush1.bf16.msra.mxu0 0
      %490 = vmatprep.subr.bf16.mxu0 0
      %491 = vmatpush1.bf16.msra.mxu0 0
      %492 = vmatprep.subr.bf16.mxu0 0
      %493 = vmatpush1.bf16.msra.mxu0 0
      %494 = vmatprep.subr.bf16.mxu0 0
      %495 = vmatpush1.bf16.msra.mxu0 0
      %496 = vmatprep.subr.bf16.mxu0 0
      %497 = vmatpush1.bf16.msra.mxu0 0
      %498 = vmatprep.subr.bf16.mxu0 0
      %499 = vmatpush1.bf16.msra.mxu0 0
      %500 = vmatprep.subr.bf16.mxu0 0
      %501 = vmatpush1.bf16.msra.mxu0 0
      %502 = vmatprep.subr.bf16.mxu0 0
      %503 = vmatpush1.bf16.msra.mxu0 0
      %504 = vmatprep.subr.bf16.mxu0 0
      %505 = vmatpush1.bf16.msra.mxu0 0
      %506 = vmatprep.subr.bf16.mxu0 0
      %507 = vmatpush1.bf16.msra.mxu0 0
      %508 = vmatprep.mubr.bf16.mxu0 0
      %509 = vmatmul.mubr.bf16.gmra.mrb[0].mxu0 %v468
      %v510 = vpop.f32.mrb[0].mxu0
      %v511 = vadd.f32 0.0, %v510
      %v512 = vpop.f32.mrb[0].mxu0
      %v513 = vpop.f32.mrb[0].mxu0
      %v514 = vadd.f32 0.0, %v513
      %v515 = vpop.f32.mrb[0].mxu0
      %516 = vmatprep.mubr.bf16.mxu0 0
      %517 = vmatmul.mubr.bf16.gmra.mrb[0].mxu0 %v471
      %v518 = vpop.f32.mrb[0].mxu0
      %v519 = vadd.f32 0.0, %v518
      %v520 = vpop.f32.mrb[0].mxu0
      %v521 = vpop.f32.mrb[0].mxu0
      %v522 = vadd.f32 0.0, %v521
      %v523 = vpop.f32.mrb[0].mxu0
      %524 = vmatprep.mubr.bf16.mxu0 0
      %525 = vmatmul.mubr.bf16.gmra.mrb[0].mxu0 %v474
      %v526 = vpop.f32.mrb[0].mxu0
      %v527 = vadd.f32 0.0, %v526
      %v528 = vpop.f32.mrb[0].mxu0
      %v529 = vpop.f32.mrb[0].mxu0
      %v530 = vpop.f32.mrb[0].mxu0
      %531 = vdwg.mxu0
      %v533 = vunpack.c.l.b16 %v386
      %v534 = vpack.c.b16 %v533, %v533
      %v543 = vunpack.c.l.b16 %v387
      %v544 = vunpack.c.l.b16 %v388
      %v545 = vunpack.c.l.b16 %v389
      %v546 = vunpack.c.l.b16 %v390
      %v547 = vunpack.c.l.b16 %v391
      %v548 = vunpack.c.l.b16 %v392
      %v549 = vunpack.c.l.b16 %v393
      %v550 = vunpack.c.l.b16 %v394
      %v551 = vpack.c.b16 %v544, %v543
      %v552 = vpack.c.b16 %v546, %v545
      %v553 = vpack.c.b16 %v548, %v547
      %v554 = vpack.c.b16 %v550, %v549
      %v559 = vsel %vm466, %v415, 0
      %v561 = vsel %vm466, %v416, 0
      %v564 = vsel %vm466, %v534, 0
      %566 = vmatprep.subr.bf16.mxu0 0
      %567 = vmatpush1.bf16.msra.mxu0 %v551
      %568 = vmatprep.subr.bf16.mxu0 0
      %569 = vmatpush1.bf16.msra.mxu0 %v552
      %570 = vmatprep.subr.bf16.mxu0 0
      %571 = vmatpush1.bf16.msra.mxu0 %v553
      %572 = vmatprep.subr.bf16.mxu0 0
      %573 = vmatpush1.bf16.msra.mxu0 %v554
      %574 = vmatprep.subr.bf16.mxu0 0
      %575 = vmatpush1.bf16.msra.mxu0 0
      %576 = vmatprep.subr.bf16.mxu0 0
      %577 = vmatpush1.bf16.msra.mxu0 0
      %578 = vmatprep.subr.bf16.mxu0 0
      %579 = vmatpush1.bf16.msra.mxu0 0
      %580 = vmatprep.subr.bf16.mxu0 0
      %581 = vmatpush1.bf16.msra.mxu0 0
      %582 = vmatprep.subr.bf16.mxu0 0
      %583 = vmatpush1.bf16.msra.mxu0 0
      %584 = vmatprep.subr.bf16.mxu0 0
      %585 = vmatpush1.bf16.msra.mxu0 0
      %586 = vmatprep.subr.bf16.mxu0 0
      %587 = vmatpush1.bf16.msra.mxu0 0
      %588 = vmatprep.subr.bf16.mxu0 0
      %589 = vmatpush1.bf16.msra.mxu0 0
      %590 = vmatprep.subr.bf16.mxu0 0
      %591 = vmatpush1.bf16.msra.mxu0 0
      %592 = vmatprep.subr.bf16.mxu0 0
      %593 = vmatpush1.bf16.msra.mxu0 0
      %594 = vmatprep.subr.bf16.mxu0 0
      %595 = vmatpush1.bf16.msra.mxu0 0
      %596 = vmatprep.subr.bf16.mxu0 0
      %597 = vmatpush1.bf16.msra.mxu0 0
      %598 = vmatprep.mubr.bf16.mxu0 0
      %599 = vmatmul.mubr.bf16.gmra.mrb[0].mxu0 %v559
      %v600 = vpop.f32.mrb[0].mxu0
      %v601 = vadd.f32 %v511, %v600
      %v602 = vpop.f32.mrb[0].mxu0
      %v603 = vpop.f32.mrb[0].mxu0
      %v604 = vadd.f32 %v514, %v603
      %v605 = vpop.f32.mrb[0].mxu0
      %606 = vmatprep.mubr.bf16.mxu0 0
      %607 = vmatmul.mubr.bf16.gmra.mrb[0].mxu0 %v561
      %v608 = vpop.f32.mrb[0].mxu0
      %v609 = vadd.f32 %v519, %v608
      %v610 = vpop.f32.mrb[0].mxu0
      %v611 = vpop.f32.mrb[0].mxu0
      %v612 = vadd.f32 %v522, %v611
      %v613 = vpop.f32.mrb[0].mxu0
      %614 = vmatprep.mubr.bf16.mxu0 0
      %615 = vmatmul.mubr.bf16.gmra.mrb[0].mxu0 %v564
      %v616 = vpop.f32.mrb[0].mxu0
      %v617 = vadd.f32 %v527, %v616
      %v618 = vpop.f32.mrb[0].mxu0
      %v619 = vpop.f32.mrb[0].mxu0
      %v620 = vpop.f32.mrb[0].mxu0
      %621 = vdwg.mxu0
      %v622 = vld [vmem:[#allocation2] sm:$0xe]
      %s623 = scalar_lea.vmem %s1, 64
      %v624 = vld [vmem:[%s623] sm:$0xf]
      %v625 = vld [vmem:[%s623 + $0x4] sm:$0xf]
      %v626 = vld [vmem:[%s623 + $0x8] sm:$0xf]
      %v627 = vld [vmem:[%s623 + $0xc] sm:$0xf]
      %v628 = vld [vmem:[%s623 + $0x10] sm:$0xf]
      %v629 = vld [vmem:[%s623 + $0x14] sm:$0xf]
      %v630 = vld [vmem:[%s623 + $0x18] sm:$0xf]
      %v631 = vld [vmem:[%s623 + $0x1c] sm:$0xf]
      %v633 = vunpack.c.l.b16 %v622
      %v634 = vpack.c.b16 %v411, %v633
      %vm635 = vcmask 1046528
      %v636 = vrot.slane %v634, 1
      %v637 = vrot.slane %v416, 1
      %v638 = vsel %vm635, %v636, %v637
      %v639 = vrot.slane %v417, 1
      %v640 = vsel %vm635, %v637, %v639
      %v649 = vunpack.c.l.b16 %v624
      %v650 = vunpack.c.l.b16 %v625
      %v651 = vunpack.c.l.b16 %v626
      %v652 = vunpack.c.l.b16 %v627
      %v653 = vunpack.c.l.b16 %v628
      %v654 = vunpack.c.l.b16 %v629
      %v655 = vunpack.c.l.b16 %v630
      %v656 = vunpack.c.l.b16 %v631
      %v657 = vpack.c.b16 %v650, %v649
      %v658 = vpack.c.b16 %v652, %v651
      %v659 = vpack.c.b16 %v654, %v653
      %v660 = vpack.c.b16 %v656, %v655
      %v666 = vsel %vm466, %v638, 0
      %v669 = vsel %vm466, %v640, 0
      %v672 = vsel %vm466, %v639, 0
      %674 = vmatprep.subr.bf16.mxu0 0
      %675 = vmatpush1.bf16.msra.mxu0 %v657
      %676 = vmatprep.subr.bf16.mxu0 0
      %677 = vmatpush1.bf16.msra.mxu0 %v658
      %678 = vmatprep.subr.bf16.mxu0 0
      %679 = vmatpush1.bf16.msra.mxu0 %v659
      %680 = vmatprep.subr.bf16.mxu0 0
      %681 = vmatpush1.bf16.msra.mxu0 %v660
      %682 = vmatprep.subr.bf16.mxu0 0
      %683 = vmatpush1.bf16.msra.mxu0 0
      %684 = vmatprep.subr.bf16.mxu0 0
      %685 = vmatpush1.bf16.msra.mxu0 0
      %686 = vmatprep.subr.bf16.mxu0 0
      %687 = vmatpush1.bf16.msra.mxu0 0
      %688 = vmatprep.subr.bf16.mxu0 0
      %689 = vmatpush1.bf16.msra.mxu0 0
      %690 = vmatprep.subr.bf16.mxu0 0
      %691 = vmatpush1.bf16.msra.mxu0 0
      %692 = vmatprep.subr.bf16.mxu0 0
      %693 = vmatpush1.bf16.msra.mxu0 0
      %694 = vmatprep.subr.bf16.mxu0 0
      %695 = vmatpush1.bf16.msra.mxu0 0
      %696 = vmatprep.subr.bf16.mxu0 0
      %697 = vmatpush1.bf16.msra.mxu0 0
      %698 = vmatprep.subr.bf16.mxu0 0
      %699 = vmatpush1.bf16.msra.mxu0 0
      %700 = vmatprep.subr.bf16.mxu0 0
      %701 = vmatpush1.bf16.msra.mxu0 0
      %702 = vmatprep.subr.bf16.mxu0 0
      %703 = vmatpush1.bf16.msra.mxu0 0
      %704 = vmatprep.subr.bf16.mxu0 0
      %705 = vmatpush1.bf16.msra.mxu0 0
      %706 = vmatprep.mubr.bf16.mxu0 0
      %707 = vmatmul.mubr.bf16.gmra.mrb[0].mxu0 %v666
      %v708 = vpop.f32.mrb[0].mxu0
      %v709 = vadd.f32 0.0, %v708
      %v710 = vpop.f32.mrb[0].mxu0
      %v711 = vpop.f32.mrb[0].mxu0
      %v712 = vadd.f32 0.0, %v711
      %v713 = vpop.f32.mrb[0].mxu0
      %714 = vmatprep.mubr.bf16.mxu0 0
      %715 = vmatmul.mubr.bf16.gmra.mrb[0].mxu0 %v669
      %v716 = vpop.f32.mrb[0].mxu0
      %v717 = vadd.f32 0.0, %v716
      %v718 = vpop.f32.mrb[0].mxu0
      %v719 = vpop.f32.mrb[0].mxu0
      %v720 = vadd.f32 0.0, %v719
      %v721 = vpop.f32.mrb[0].mxu0
      %722 = vmatprep.mubr.bf16.mxu0 0
      %723 = vmatmul.mubr.bf16.gmra.mrb[0].mxu0 %v672
      %v724 = vpop.f32.mrb[0].mxu0
      %v725 = vadd.f32 0.0, %v724
      %v726 = vpop.f32.mrb[0].mxu0
      %v727 = vpop.f32.mrb[0].mxu0
      %v728 = vpop.f32.mrb[0].mxu0
      %729 = vdwg.mxu0
      %v730 = vadd.f32 %v601, %v709
      %v731 = vadd.f32 %v604, %v712
      %v732 = vadd.f32 %v609, %v717
      %v733 = vadd.f32 %v612, %v720
      %v734 = vadd.f32 %v617, %v725
      %v735 = vld [vmem:[%s2] sm:$0x1]
      %v737 = vlaneseq
      %v738 = vshrl.u32 %v737, 7
      %v739 = vsub.s32 0, %v738
      %v740 = vrot.slane %v735, %v739
      %v742 = vmul.f32 %v730, %v740
      %v743 = vmul.f32 %v731, %v740
      %v744 = vmul.f32 %v732, %v740
      %v745 = vmul.f32 %v733, %v740
      %v746 = vmul.f32 %v734, %v740
      %v747 = vld [vmem:[%s3] sm:$0x1]
      %v749 = vlaneseq
      %v750 = vshrl.u32 %v749, 7
      %v751 = vsub.s32 0, %v750
      %v752 = vrot.slane %v747, %v751
      %v754 = vadd.f32 %v742, %v752
      %v755 = vadd.f32 %v743, %v752
      %v756 = vadd.f32 %v744, %v752
      %v757 = vadd.f32 %v745, %v752
      %v758 = vadd.f32 %v746, %v752
      %v759 = vmax.f32 %v754, 0.0
      %v760 = vmax.f32 %v755, 0.0
      %v761 = vmax.f32 %v756, 0.0
      %v762 = vmax.f32 %v757, 0.0
      %v763 = vmax.f32 %v758, 0.0
      %v764 = vpack.c.bf16 %v760, %v759
      %v765 = vpack.c.bf16 %v762, %v761
      %v766 = vpack.c.bf16 %v763, %v763
      %v770 = vunpack.c.l.b16 %v764
      %v771 = vunpack.c.h.b16 %v764
      %v772 = vunpack.c.l.b16 %v765
      %v773 = vunpack.c.h.b16 %v765
      %v774 = vunpack.c.l.b16 %v766
      %v775 = vpack.c.b16 %v770, %v770
      %v776 = vpack.c.b16 %v771, %v771
      %v777 = vpack.c.b16 %v772, %v772
      %v778 = vpack.c.b16 %v773, %v773
      %v779 = vpack.c.b16 %v774, %v774
      %v781 = vshrl.u32 %v775, 16
      %v783 = vrot.slane %v781, 7
      %v784 = vshll.u32 %v775, 16
      %v786 = vor.u32 %v783, %v784
      %v787 = vrot.slane %v783, 4
      %v789 = vshrl.u32 %v776, 16
      %v791 = vrot.slane %v789, 7
      %v792 = vshll.u32 %v776, 16
      %v794 = vor.u32 %v791, %v792
      %v795 = vsel %vm302, %v787, %v794
      %v796 = vrot.slane %v791, 4
      %v798 = vshrl.u32 %v777, 16
      %v800 = vrot.slane %v798, 7
      %v801 = vshll.u32 %v777, 16
      %v803 = vor.u32 %v800, %v801
      %v804 = vsel %vm302, %v796, %v803
      %v805 = vrot.slane %v800, 4
      %v807 = vshrl.u32 %v778, 16
      %v809 = vrot.slane %v807, 7
      %v810 = vshll.u32 %v778, 16
      %v812 = vor.u32 %v809, %v810
      %v813 = vsel %vm302, %v805, %v812
      %v814 = vrot.slane %v809, 4
      %v816 = vshrl.u32 %v779, 16
      %v818 = vrot.slane %v816, 7
      %v819 = vshll.u32 %v779, 16
      %v821 = vor.u32 %v818, %v819
      %v822 = vsel %vm302, %v814, %v821
      %vm828 = vcmask 1043456
      %vm829 = vmand %vm828, %vm294
      %v830 = vld [vmem:[#allocation3] sm:$0xf]
      %v831 = vsel %vm829, %v786, %v830
      %832 = vst [vmem:[#allocation3] sm:$0xf] %v831
      %833 = vst [vmem:[#allocation3 + $0x4] sm:$0xf] %v795
      %834 = vst [vmem:[#allocation3 + $0x8] sm:$0xf] %v804
      %835 = vst [vmem:[#allocation3 + $0xc] sm:$0xf] %v813
      %vm836 = vcmask 1041408
      %vm837 = vmand %vm836, %vm334
      %v838 = vld [vmem:[#allocation3 + $0x10] sm:$0x3]
      %v839 = vsel %vm837, %v822, %v838
      %840 = vst [vmem:[#allocation3 + $0x10] sm:$0x3] %v839
      %vm841 = vcmask 1040384
      %vm842 = vmand %vm841, %vm289
      %v843 = vld [vmem:[#allocation3] sm:$0x1]
      %v844 = vsel %vm842, 0, %v843
      %845 = vst [vmem:[#allocation3] sm:$0x1] %v844
      %vm846 = vmand %vm841, %vm294
      %v847 = vld [vmem:[#allocation3 + $0x8] sm:$0x1]
      %v848 = vsel %vm846, 0, %v847
      %849 = vst [vmem:[#allocation3 + $0x8] sm:$0x1] %v848
      %vm850 = vcmask 1041409
      %vm851 = vmand %vm850, %vm334
      %v852 = vld [vmem:[#allocation3 + $0x8] sm:$0x2]
      %v853 = vsel %vm851, 0, %v852
      %854 = vst [vmem:[#allocation3 + $0x8] sm:$0x2] %v853
      %vm855 = vmand %vm850, %vm339
      %v856 = vld [vmem:[#allocation3 + $0x10] sm:$0x2]
      %v857 = vsel %vm855, 0, %v856
      %858 = vst [vmem:[#allocation3 + $0x10] sm:$0x2] %v857
      %v859 = vld [vmem:[#allocation3] sm:$0xf]
      %v860 = vld [vmem:[#allocation3 + $0x4] sm:$0xf]
      %v861 = vld [vmem:[#allocation3 + $0x8] sm:$0xf]
      %v862 = vld [vmem:[#allocation3 + $0xc] sm:$0xf]
      %v863 = vld [vmem:[#allocation3 + $0x10] sm:$0x1]
      %v864 = vld [vmem:[%s4] sm:$0xf]
      %v865 = vld [vmem:[%s4 + $0x4] sm:$0xf]
      %v866 = vld [vmem:[%s4 + $0x8] sm:$0xf]
      %v867 = vld [vmem:[%s4 + $0xc] sm:$0xf]
      %v868 = vld [vmem:[%s4 + $0x10] sm:$0xf]
      %v869 = vld [vmem:[%s4 + $0x14] sm:$0xf]
      %v870 = vld [vmem:[%s4 + $0x18] sm:$0xf]
      %v871 = vld [vmem:[%s4 + $0x1c] sm:$0xf]
      %v872 = vld [vmem:[%s4 + $0x20] sm:$0xf]
      %v873 = vld [vmem:[%s4 + $0x24] sm:$0xf]
      %v874 = vld [vmem:[%s4 + $0x28] sm:$0xf]
      %v875 = vld [vmem:[%s4 + $0x2c] sm:$0xf]
      %v876 = vld [vmem:[%s4 + $0x30] sm:$0xf]
      %v877 = vld [vmem:[%s4 + $0x34] sm:$0xf]
      %v878 = vld [vmem:[%s4 + $0x38] sm:$0xf]
      %v879 = vld [vmem:[%s4 + $0x3c] sm:$0xf]
      %v880 = vld [vmem:[#allocation3 + $0x10] sm:$0x3]
      %s881 = scalar_lea.vmem %s4, 64
      %v882 = vld [vmem:[%s881] sm:$0xf]
      %v883 = vld [vmem:[%s881 + $0x4] sm:$0xf]
      %v884 = vld [vmem:[%s881 + $0x8] sm:$0xf]
      %v885 = vld [vmem:[%s881 + $0xc] sm:$0xf]
      %v886 = vld [vmem:[%s881 + $0x10] sm:$0xf]
      %v887 = vld [vmem:[%s881 + $0x14] sm:$0xf]
      %v888 = vld [vmem:[%s881 + $0x18] sm:$0xf]
      %v889 = vld [vmem:[%s881 + $0x1c] sm:$0xf]
      %v890 = vld [vmem:[%s881 + $0x20] sm:$0xf]
      %v891 = vld [vmem:[%s881 + $0x24] sm:$0xf]
      %v892 = vld [vmem:[%s881 + $0x28] sm:$0xf]
      %v893 = vld [vmem:[%s881 + $0x2c] sm:$0xf]
      %v894 = vld [vmem:[%s881 + $0x30] sm:$0xf]
      %v895 = vld [vmem:[%s881 + $0x34] sm:$0xf]
      %v896 = vld [vmem:[%s881 + $0x38] sm:$0xf]
      %v897 = vld [vmem:[%s881 + $0x3c] sm:$0xf]
      %v903 = vunpack.c.l.b16 %v859
      %v904 = vunpack.c.l.b16 %v860
      %v905 = vunpack.c.l.b16 %v861
      %v906 = vunpack.c.l.b16 %v862
      %v907 = vunpack.c.l.b16 %v880
      %v908 = vpack.c.b16 %v904, %v903
      %v909 = vpack.c.b16 %v906, %v905
      %v910 = vpack.c.b16 %v907, %v907
      %v912 = vshrl.u32 %v908, 16
      %v914 = vshll.u32 %v908, 16
      %v916 = vrot.slane %v914, 1
      %v917 = vor.u32 %v912, %v916
      %v919 = vshll.u32 %v909, 16
      %v921 = vrot.slane %v919, 1
      %v922 = vsel %vm418, %v917, %v921
      %v923 = vshrl.u32 %v909, 16
      %v925 = vor.u32 %v923, %v921
      %v927 = vshll.u32 %v910, 16
      %v929 = vrot.slane %v927, 1
      %v930 = vsel %vm418, %v925, %v929
      %v931 = vshrl.u32 %v910, 16
      %v933 = vor.u32 %v931, %v929
      %v953 = vunpack.c.l.b16 %v882
      %v954 = vunpack.c.l.b16 %v883
      %v955 = vunpack.c.l.b16 %v884
      %v956 = vunpack.c.l.b16 %v885
      %v957 = vunpack.c.l.b16 %v886
      %v958 = vunpack.c.l.b16 %v887
      %v959 = vunpack.c.l.b16 %v888
      %v960 = vunpack.c.l.b16 %v889
      %v961 = vunpack.c.l.b16 %v890
      %v962 = vunpack.c.l.b16 %v891
      %v963 = vunpack.c.l.b16 %v892
      %v964 = vunpack.c.l.b16 %v893
      %v965 = vunpack.c.l.b16 %v894
      %v966 = vunpack.c.l.b16 %v895
      %v967 = vunpack.c.l.b16 %v896
      %v968 = vunpack.c.l.b16 %v897
      %v969 = vpack.c.b16 %v954, %v953
      %v970 = vpack.c.b16 %v956, %v955
      %v971 = vpack.c.b16 %v958, %v957
      %v972 = vpack.c.b16 %v960, %v959
      %v973 = vpack.c.b16 %v962, %v961
      %v974 = vpack.c.b16 %v964, %v963
      %v975 = vpack.c.b16 %v966, %v965
      %v976 = vpack.c.b16 %v968, %v967
      %985 = vmatprep.subr.bf16.mxu0 0
      %986 = vmatpush1.bf16.msra.mxu0 %v969
      %987 = vmatprep.subr.bf16.mxu0 0
      %988 = vmatpush1.bf16.msra.mxu0 %v970
      %989 = vmatprep.subr.bf16.mxu0 0
      %990 = vmatpush1.bf16.msra.mxu0 %v971
      %991 = vmatprep.subr.bf16.mxu0 0
      %992 = vmatpush1.bf16.msra.mxu0 %v972
      %993 = vmatprep.subr.bf16.mxu0 0
      %994 = vmatpush1.bf16.msra.mxu0 %v973
      %995 = vmatprep.subr.bf16.mxu0 0
      %996 = vmatpush1.bf16.msra.mxu0 %v974
      %997 = vmatprep.subr.bf16.mxu0 0
      %998 = vmatpush1.bf16.msra.mxu0 %v975
      %999 = vmatprep.subr.bf16.mxu0 0
      %1000 = vmatpush1.bf16.msra.mxu0 %v976
      %1001 = vmatprep.subr.bf16.mxu0 0
      %1002 = vmatpush1.bf16.msra.mxu0 0
      %1003 = vmatprep.subr.bf16.mxu0 0
      %1004 = vmatpush1.bf16.msra.mxu0 0
      %1005 = vmatprep.subr.bf16.mxu0 0
      %1006 = vmatpush1.bf16.msra.mxu0 0
      %1007 = vmatprep.subr.bf16.mxu0 0
      %1008 = vmatpush1.bf16.msra.mxu0 0
      %1009 = vmatprep.subr.bf16.mxu0 0
      %1010 = vmatpush1.bf16.msra.mxu0 0
      %1011 = vmatprep.subr.bf16.mxu0 0
      %1012 = vmatpush1.bf16.msra.mxu0 0
      %1013 = vmatprep.subr.bf16.mxu0 0
      %1014 = vmatpush1.bf16.msra.mxu0 0
      %1015 = vmatprep.subr.bf16.mxu0 0
      %1016 = vmatpush1.bf16.msra.mxu0 0
      %1017 = vmatprep.mubr.bf16.mxu0 0
      %1018 = vmatmul.mubr.bf16.gmra.mrb[0].mxu0 %v922
      %v1019 = vpop.f32.mrb[0].mxu0
      %v1020 = vadd.f32 0.0, %v1019
      %v1021 = vpop.f32.mrb[0].mxu0
      %v1022 = vpop.f32.mrb[0].mxu0
      %v1023 = vadd.f32 0.0, %v1022
      %v1024 = vpop.f32.mrb[0].mxu0
      %1025 = vmatprep.mubr.bf16.mxu0 0
      %1026 = vmatmul.mubr.bf16.gmra.mrb[0].mxu0 %v930
      %v1027 = vpop.f32.mrb[0].mxu0
      %v1028 = vadd.f32 0.0, %v1027
      %v1029 = vpop.f32.mrb[0].mxu0
      %v1030 = vpop.f32.mrb[0].mxu0
      %v1031 = vadd.f32 0.0, %v1030
      %v1032 = vpop.f32.mrb[0].mxu0
      %1033 = vmatprep.mubr.bf16.mxu0 0
      %1034 = vmatmul.mubr.bf16.gmra.mrb[0].mxu0 %v933
      %v1035 = vpop.f32.mrb[0].mxu0
      %v1036 = vadd.f32 0.0, %v1035
      %v1037 = vpop.f32.mrb[0].mxu0
      %v1038 = vpop.f32.mrb[0].mxu0
      %v1039 = vpop.f32.mrb[0].mxu0
      %1040 = vdwg.mxu0
      %v1042 = vunpack.c.l.b16 %v863
      %v1043 = vpack.c.b16 %v1042, %v1042
      %v1063 = vunpack.c.l.b16 %v864
      %v1064 = vunpack.c.l.b16 %v865
      %v1065 = vunpack.c.l.b16 %v866
      %v1066 = vunpack.c.l.b16 %v867
      %v1067 = vunpack.c.l.b16 %v868
      %v1068 = vunpack.c.l.b16 %v869
      %v1069 = vunpack.c.l.b16 %v870
      %v1070 = vunpack.c.l.b16 %v871
      %v1071 = vunpack.c.l.b16 %v872
      %v1072 = vunpack.c.l.b16 %v873
      %v1073 = vunpack.c.l.b16 %v874
      %v1074 = vunpack.c.l.b16 %v875
      %v1075 = vunpack.c.l.b16 %v876
      %v1076 = vunpack.c.l.b16 %v877
      %v1077 = vunpack.c.l.b16 %v878
      %v1078 = vunpack.c.l.b16 %v879
      %v1079 = vpack.c.b16 %v1064, %v1063
      %v1080 = vpack.c.b16 %v1066, %v1065
      %v1081 = vpack.c.b16 %v1068, %v1067
      %v1082 = vpack.c.b16 %v1070, %v1069
      %v1083 = vpack.c.b16 %v1072, %v1071
      %v1084 = vpack.c.b16 %v1074, %v1073
      %v1085 = vpack.c.b16 %v1076, %v1075
      %v1086 = vpack.c.b16 %v1078, %v1077
      %1095 = vmatprep.subr.bf16.mxu0 0
      %1096 = vmatpush1.bf16.msra.mxu0 %v1079
      %1097 = vmatprep.subr.bf16.mxu0 0
      %1098 = vmatpush1.bf16.msra.mxu0 %v1080
      %1099 = vmatprep.subr.bf16.mxu0 0
      %1100 = vmatpush1.bf16.msra.mxu0 %v1081
      %1101 = vmatprep.subr.bf16.mxu0 0
      %1102 = vmatpush1.bf16.msra.mxu0 %v1082
      %1103 = vmatprep.subr.bf16.mxu0 0
      %1104 = vmatpush1.bf16.msra.mxu0 %v1083
      %1105 = vmatprep.subr.bf16.mxu0 0
      %1106 = vmatpush1.bf16.msra.mxu0 %v1084
      %1107 = vmatprep.subr.bf16.mxu0 0
      %1108 = vmatpush1.bf16.msra.mxu0 %v1085
      %1109 = vmatprep.subr.bf16.mxu0 0
      %1110 = vmatpush1.bf16.msra.mxu0 %v1086
      %1111 = vmatprep.subr.bf16.mxu0 0
      %1112 = vmatpush1.bf16.msra.mxu0 0
      %1113 = vmatprep.subr.bf16.mxu0 0
      %1114 = vmatpush1.bf16.msra.mxu0 0
      %1115 = vmatprep.subr.bf16.mxu0 0
      %1116 = vmatpush1.bf16.msra.mxu0 0
      %1117 = vmatprep.subr.bf16.mxu0 0
      %1118 = vmatpush1.bf16.msra.mxu0 0
      %1119 = vmatprep.subr.bf16.mxu0 0
      %1120 = vmatpush1.bf16.msra.mxu0 0
      %1121 = vmatprep.subr.bf16.mxu0 0
      %1122 = vmatpush1.bf16.msra.mxu0 0
      %1123 = vmatprep.subr.bf16.mxu0 0
      %1124 = vmatpush1.bf16.msra.mxu0 0
      %1125 = vmatprep.subr.bf16.mxu0 0
      %1126 = vmatpush1.bf16.msra.mxu0 0
      %1127 = vmatprep.mubr.bf16.mxu0 0
      %1128 = vmatmul.mubr.bf16.gmra.mrb[0].mxu0 %v908
      %v1129 = vpop.f32.mrb[0].mxu0
      %v1130 = vadd.f32 %v1020, %v1129
      %v1131 = vpop.f32.mrb[0].mxu0
      %v1132 = vpop.f32.mrb[0].mxu0
      %v1133 = vadd.f32 %v1023, %v1132
      %v1134 = vpop.f32.mrb[0].mxu0
      %1135 = vmatprep.mubr.bf16.mxu0 0
      %1136 = vmatmul.mubr.bf16.gmra.mrb[0].mxu0 %v909
      %v1137 = vpop.f32.mrb[0].mxu0
      %v1138 = vadd.f32 %v1028, %v1137
      %v1139 = vpop.f32.mrb[0].mxu0
      %v1140 = vpop.f32.mrb[0].mxu0
      %v1141 = vadd.f32 %v1031, %v1140
      %v1142 = vpop.f32.mrb[0].mxu0
      %1143 = vmatprep.mubr.bf16.mxu0 0
      %1144 = vmatmul.mubr.bf16.gmra.mrb[0].mxu0 %v1043
      %v1145 = vpop.f32.mrb[0].mxu0
      %v1146 = vadd.f32 %v1036, %v1145
      %v1147 = vpop.f32.mrb[0].mxu0
      %v1148 = vpop.f32.mrb[0].mxu0
      %v1149 = vpop.f32.mrb[0].mxu0
      %1150 = vdwg.mxu0
      %v1151 = vld [vmem:[#allocation3] sm:$0xe]
      %s1152 = scalar_lea.vmem %s4, 128
      %v1153 = vld [vmem:[%s1152] sm:$0xf]
      %v1154 = vld [vmem:[%s1152 + $0x4] sm:$0xf]
      %v1155 = vld [vmem:[%s1152 + $0x8] sm:$0xf]
      %v1156 = vld [vmem:[%s1152 + $0xc] sm:$0xf]
      %v1157 = vld [vmem:[%s1152 + $0x10] sm:$0xf]
      %v1158 = vld [vmem:[%s1152 + $0x14] sm:$0xf]
      %v1159 = vld [vmem:[%s1152 + $0x18] sm:$0xf]
      %v1160 = vld [vmem:[%s1152 + $0x1c] sm:$0xf]
      %v1161 = vld [vmem:[%s1152 + $0x20] sm:$0xf]
      %v1162 = vld [vmem:[%s1152 + $0x24] sm:$0xf]
      %v1163 = vld [vmem:[%s1152 + $0x28] sm:$0xf]
      %v1164 = vld [vmem:[%s1152 + $0x2c] sm:$0xf]
      %v1165 = vld [vmem:[%s1152 + $0x30] sm:$0xf]
      %v1166 = vld [vmem:[%s1152 + $0x34] sm:$0xf]
      %v1167 = vld [vmem:[%s1152 + $0x38] sm:$0xf]
      %v1168 = vld [vmem:[%s1152 + $0x3c] sm:$0xf]
      %v1170 = vunpack.c.l.b16 %v1151
      %v1171 = vpack.c.b16 %v904, %v1170
      %v1172 = vrot.slane %v1171, 1
      %v1173 = vrot.slane %v909, 1
      %v1174 = vsel %vm635, %v1172, %v1173
      %v1175 = vrot.slane %v910, 1
      %v1176 = vsel %vm635, %v1173, %v1175
      %v1196 = vunpack.c.l.b16 %v1153
      %v1197 = vunpack.c.l.b16 %v1154
      %v1198 = vunpack.c.l.b16 %v1155
      %v1199 = vunpack.c.l.b16 %v1156
      %v1200 = vunpack.c.l.b16 %v1157
      %v1201 = vunpack.c.l.b16 %v1158
      %v1202 = vunpack.c.l.b16 %v1159
      %v1203 = vunpack.c.l.b16 %v1160
      %v1204 = vunpack.c.l.b16 %v1161
      %v1205 = vunpack.c.l.b16 %v1162
      %v1206 = vunpack.c.l.b16 %v1163
      %v1207 = vunpack.c.l.b16 %v1164
      %v1208 = vunpack.c.l.b16 %v1165
      %v1209 = vunpack.c.l.b16 %v1166
      %v1210 = vunpack.c.l.b16 %v1167
      %v1211 = vunpack.c.l.b16 %v1168
      %v1212 = vpack.c.b16 %v1197, %v1196
      %v1213 = vpack.c.b16 %v1199, %v1198
      %v1214 = vpack.c.b16 %v1201, %v1200
      %v1215 = vpack.c.b16 %v1203, %v1202
      %v1216 = vpack.c.b16 %v1205, %v1204
      %v1217 = vpack.c.b16 %v1207, %v1206
      %v1218 = vpack.c.b16 %v1209, %v1208
      %v1219 = vpack.c.b16 %v1211, %v1210
      %1228 = vmatprep.subr.bf16.mxu0 0
      %1229 = vmatpush1.bf16.msra.mxu0 %v1212
      %1230 = vmatprep.subr.bf16.mxu0 0
      %1231 = vmatpush1.bf16.msra.mxu0 %v1213
      %1232 = vmatprep.subr.bf16.mxu0 0
      %1233 = vmatpush1.bf16.msra.mxu0 %v1214
      %1234 = vmatprep.subr.bf16.mxu0 0
      %1235 = vmatpush1.bf16.msra.mxu0 %v1215
      %1236 = vmatprep.subr.bf16.mxu0 0
      %1237 = vmatpush1.bf16.msra.mxu0 %v1216
      %1238 = vmatprep.subr.bf16.mxu0 0
      %1239 = vmatpush1.bf16.msra.mxu0 %v1217
      %1240 = vmatprep.subr.bf16.mxu0 0
      %1241 = vmatpush1.bf16.msra.mxu0 %v1218
      %1242 = vmatprep.subr.bf16.mxu0 0
      %1243 = vmatpush1.bf16.msra.mxu0 %v1219
      %1244 = vmatprep.subr.bf16.mxu0 0
      %1245 = vmatpush1.bf16.msra.mxu0 0
      %1246 = vmatprep.subr.bf16.mxu0 0
      %1247 = vmatpush1.bf16.msra.mxu0 0
      %1248 = vmatprep.subr.bf16.mxu0 0
      %1249 = vmatpush1.bf16.msra.mxu0 0
      %1250 = vmatprep.subr.bf16.mxu0 0
      %1251 = vmatpush1.bf16.msra.mxu0 0
      %1252 = vmatprep.subr.bf16.mxu0 0
      %1253 = vmatpush1.bf16.msra.mxu0 0
      %1254 = vmatprep.subr.bf16.mxu0 0
      %1255 = vmatpush1.bf16.msra.mxu0 0
      %1256 = vmatprep.subr.bf16.mxu0 0
      %1257 = vmatpush1.bf16.msra.mxu0 0
      %1258 = vmatprep.subr.bf16.mxu0 0
      %1259 = vmatpush1.bf16.msra.mxu0 0
      %1260 = vmatprep.mubr.bf16.mxu0 0
      %1261 = vmatmul.mubr.bf16.gmra.mrb[0].mxu0 %v1174
      %v1262 = vpop.f32.mrb[0].mxu0
      %v1263 = vadd.f32 0.0, %v1262
      %v1264 = vpop.f32.mrb[0].mxu0
      %v1265 = vpop.f32.mrb[0].mxu0
      %v1266 = vadd.f32 0.0, %v1265
      %v1267 = vpop.f32.mrb[0].mxu0
      %1268 = vmatprep.mubr.bf16.mxu0 0
      %1269 = vmatmul.mubr.bf16.gmra.mrb[0].mxu0 %v1176
      %v1270 = vpop.f32.mrb[0].mxu0
      %v1271 = vadd.f32 0.0, %v1270
      %v1272 = vpop.f32.mrb[0].mxu0
      %v1273 = vpop.f32.mrb[0].mxu0
      %v1274 = vadd.f32 0.0, %v1273
      %v1275 = vpop.f32.mrb[0].mxu0
      %1276 = vmatprep.mubr.bf16.mxu0 0
      %1277 = vmatmul.mubr.bf16.gmra.mrb[0].mxu0 %v1175
      %v1278 = vpop.f32.mrb[0].mxu0
      %v1279 = vadd.f32 0.0, %v1278
      %v1280 = vpop.f32.mrb[0].mxu0
      %v1281 = vpop.f32.mrb[0].mxu0
      %v1282 = vpop.f32.mrb[0].mxu0
      %1283 = vdwg.mxu0
      %v1284 = vadd.f32 %v1130, %v1263
      %v1285 = vadd.f32 %v1133, %v1266
      %v1286 = vadd.f32 %v1138, %v1271
      %v1287 = vadd.f32 %v1141, %v1274
      %v1288 = vadd.f32 %v1146, %v1279
      %v1289 = vld [vmem:[%s5] sm:$0x1]
      %v1291 = vlaneseq
      %v1292 = vshrl.u32 %v1291, 7
      %v1293 = vsub.s32 0, %v1292
      %v1294 = vrot.slane %v1289, %v1293
      %v1296 = vmul.f32 %v1284, %v1294
      %v1297 = vmul.f32 %v1285, %v1294
      %v1298 = vmul.f32 %v1286, %v1294
      %v1299 = vmul.f32 %v1287, %v1294
      %v1300 = vmul.f32 %v1288, %v1294
      %v1301 = vld [vmem:[%s6] sm:$0x1]
      %v1303 = vlaneseq
      %v1304 = vshrl.u32 %v1303, 7
      %v1305 = vsub.s32 0, %v1304
      %v1306 = vrot.slane %v1301, %v1305
      %v1308 = vadd.f32 %v1296, %v1306
      %v1309 = vadd.f32 %v1297, %v1306
      %v1310 = vadd.f32 %v1298, %v1306
      %v1311 = vadd.f32 %v1299, %v1306
      %v1312 = vadd.f32 %v1300, %v1306
      %v1313 = vmax.f32 %v1308, 0.0
      %v1314 = vmax.f32 %v1309, 0.0
      %v1315 = vmax.f32 %v1310, 0.0
      %v1316 = vmax.f32 %v1311, 0.0
      %v1317 = vmax.f32 %v1312, 0.0
      %1318 = vst [vmem:[%s285] sm:$0xff] %v1313
      %1319 = vst [vmem:[%s285 + $0x8] sm:$0xff] %v1314
      %s1320 = scalar_lea.vmem %s285, 16
      %1321 = vst [vmem:[%s1320 - $0x2] sm:$0xfc] %v1315
      %1322 = vst [vmem:[%s1320 + $0x6] sm:$0xff] %v1316
      %1323 = vst [vmem:[%s1320 + $0xe] sm:$0x3] %v1317
      %s1324 = smul.u32 2, %s18
      %p1325 = scmp.lt.s32.totalorder %s1324, 3
      %s1326 = scalar_select %p1325, %s1324, 3
      %s1327 = smul.addr %s1326, 2
      %s1328 = smul.addr %s1327, 8
      %s1329 = scalar_lea.vmem %s7, %s1328
      // Predicated region
      $region49: #{a_call__.1} parent=47 // pred_check
        %p1330 = pneg %p188
      $region50: #{a_call__.1} parent=47 // pred_check_branch
        %1332 = sbr.rel (%p1330) target = $region52
      $region51: #{a_call__.1} parent=47 // pred_region
        %s1333 = smul.u32 2, %s18
      $region52: #{a_call__.1} parent=47 // pred_fallthru
        _
    $region48: #{a_call__.1} parent=5 // pred_fallthru
      _
    %p1334 = scmp.le.s32.totalorder 2, %s13
    // Predicated region
    $region53: #{a_call__.1} parent=5 // pred_check
      %p1335 = pneg %p1334
    $region54: #{a_call__.1} parent=5 // pred_check_branch
      %1337 = sbr.rel (%p1335) target = $region56
    $region55: #{a_call__.1} parent=5 // pred_region
      %s1338 = ssub.s32 %s13, 2
      // Predicated region
      $region57: #{a_call__.1} parent=55 // pred_check
        %p1339 = pneg %p194
      $region58: #{a_call__.1} parent=55 // pred_check_branch
        %1341 = sbr.rel (%p1339) target = $region60
      $region59: #{a_call__.1} parent=55 // pred_region
        %s1342 = smul.u32 2, %s19
        %p1343 = scmp.lt.s32.totalorder %s1342, 3
        %s1344 = scalar_select %p1343, %s1342, 3
        %s1345 = smul.addr %s1344, 2
        %s1346 = smul.addr %s1345, 8
        %s1347 = scalar_lea.vmem %s7, %s1346
      $region60: #{a_call__.1} parent=55 // pred_fallthru
        _
    $region56: #{a_call__.1} parent=5 // pred_fallthru
      _
  $region6: #{a_call__.1} parent=0 // loop_footer
    %s17 = sadd.s32 1, %s13
  $region7: #{a_call__.1} parent=0 // loop_footer_branch
    %12 = sbr.rel target = $region3
  $region8: #{a_call__.1} parent=0 // loop_exit
    _

</llo_original>
